<compile_context>
chip_gen: v7x
topology: tpu7x:2x2x1
jax: 0.10.0
libtpu: 0.0.40
codegen_flags: <defaults>
</compile_context>

<pallas_src>
import jax
import jax.numpy as jnp
from jax.experimental import pallas as pl
from jax.experimental.pallas import tpu as pltpu

_LANE = 128


def _round_up(n, m):
    return (n + m - 1) // m * m


def block3_kernel(x_ref,
                  w1_ref, w2_ref, w3_ref, w4_ref,
                  t1_ref, t2_ref, t3_ref, t4_ref,
                  o_ref):
    """Fused 4-layer MLP tile: swish(h @ W + shift), repeated 4 times."""

    def layer(h, w_ref, t_ref):
        z = jnp.dot(h.astype(w_ref.dtype), w_ref[...],
                    preferred_element_type=jnp.float32)
        z = z + t_ref[...]                      # folded Linear bias + BatchNorm
        # Swish: z * sigmoid(z). exp and the approx reciprocal both run on the
        # EUP slot; the exponent is clamped so exp never overflows to inf.
        ez = jnp.exp(jnp.minimum(-z, 80.0))
        return z * pl.reciprocal(1.0 + ez, approx=True)

    h = x_ref[...]
    h = layer(h, w1_ref, t1_ref)
    h = layer(h, w2_ref, t2_ref)
    h = layer(h, w3_ref, t3_ref)
    h = layer(h, w4_ref, t4_ref)
    o_ref[...] = h.astype(o_ref.dtype)


def fold_params(raw, eps=1e-5):
    """Fold eval-mode BatchNorm1d + Linear bias into (W_folded, shift) per layer."""
    folded = []
    for (W, b, gamma, beta, mean, var) in raw:
        scale = gamma / jnp.sqrt(var + eps)              # (dout,)
        W_f = W * scale[None, :]                         # (din, dout)
        shift = (b - mean) * scale + beta                # (dout,)
        folded.append((W_f, shift))
    return folded


def block3_pallas(x, folded_params, *, tile_b=256, compute_dtype=jnp.bfloat16):
    """x: (B, D) float32; folded_params: 4 x (W (din, dout), shift (dout,))."""
    B, D = x.shape
    out_dtype = x.dtype
    cdt = jnp.dtype(compute_dtype)

    # --- pad feature dims to lane multiples and cast weights -----------------
    ws_p, ts_p, dims_p = [], [], []
    for (W_f, shift) in folded_params:
        din, dout = W_f.shape
        din_p, dout_p = _round_up(din, _LANE), _round_up(dout, _LANE)
        ws_p.append(jnp.pad(W_f, ((0, din_p - din), (0, dout_p - dout)))
                    .astype(compute_dtype))
        ts_p.append(jnp.pad(shift.reshape(1, dout).astype(jnp.float32),
                            ((0, 0), (0, dout_p - dout))))
        dims_p.append((din_p, dout_p))
    Dp = dims_p[0][0]
    assert dims_p[-1][1] == _round_up(D, _LANE) == Dp

    # --- batch tiling: sublane-multiple tile on a "parallel" grid ------------
    sub = 8 * (4 // cdt.itemsize)                 # 8 rows for f32, 16 for bf16
    tb = max(sub, min(_round_up(tile_b, sub), _round_up(B, sub)))
    Bp = _round_up(B, tb)
    x_p = jnp.pad(x, ((0, Bp - B), (0, Dp - D))).astype(compute_dtype)

    # --- VMEM budget (capped at v7x's 64 MiB) & advisory cost estimate -------
    param_bytes = sum(int(a.size) * a.dtype.itemsize for a in ws_p + ts_p)
    io_tile_bytes = tb * Dp * (cdt.itemsize + jnp.dtype(out_dtype).itemsize)
    act_bytes = 4 * tb * max(d for _, d in dims_p) * 4      # intermediate headroom
    vmem_limit = int(min(64 << 20,
                         max(32 << 20,
                             2 * (param_bytes + 2 * io_tile_bytes + act_bytes))))
    cost = pl.CostEstimate(
        flops=int(2 * Bp * sum(a * b for a, b in dims_p)),
        transcendentals=int(2 * Bp * sum(b for _, b in dims_p)),   # exp + recip
        bytes_accessed=int(param_bytes + Bp * Dp *
                           (cdt.itemsize + jnp.dtype(out_dtype).itemsize)),
    )

    def run(param_pipeline_mode):
        def const_spec(shape):
            if param_pipeline_mode is None:
                return pl.BlockSpec(shape, lambda i: (0, 0))
            return pl.BlockSpec(shape, lambda i: (0, 0),
                                pipeline_mode=param_pipeline_mode)

        in_specs = [pl.BlockSpec((tb, Dp), lambda i: (i, 0))]
        in_specs += [const_spec(w.shape) for w in ws_p]
        in_specs += [const_spec(t.shape) for t in ts_p]

        return pl.pallas_call(
            block3_kernel,
            out_shape=jax.ShapeDtypeStruct((Bp, Dp), out_dtype),
            grid=(Bp // tb,),
            in_specs=in_specs,
            out_specs=pl.BlockSpec((tb, Dp), lambda i: (i, 0)),
            compiler_params=pltpu.CompilerParams(
                dimension_semantics=("parallel",),
                vmem_limit_bytes=vmem_limit),
            cost_estimate=cost,
        )(x_p, *ws_p, *ts_p)

    try:
        # Constant-index weights/shifts only need a single VMEM buffer.
        out_p = run(pl.Buffered(1))
    except Exception:
        out_p = run(None)       # fall back to default double-buffering

    return out_p[:B, :D]


def make_params(key, in_shape):
    """Deterministic PyTorch-style params: (W, b, gamma, beta, run_mean, run_var)."""
    dims = [(in_shape, in_shape * 2),
            (in_shape * 2, in_shape * 3),
            (in_shape * 3, in_shape * 2),
            (in_shape * 2, in_shape)]
    raw = []
    for (din, dout) in dims:
        key, kw, kb, kg, kbe, km, kv = jax.random.split(key, 7)
        W = jax.random.normal(kw, (din, dout), jnp.float32) / jnp.sqrt(din)
        b = 0.1 * jax.random.normal(kb, (dout,), jnp.float32)
        gamma = 1.0 + 0.1 * jax.random.normal(kg, (dout,), jnp.float32)
        beta = 0.1 * jax.random.normal(kbe, (dout,), jnp.float32)
        mean = 0.1 * jax.random.normal(km, (dout,), jnp.float32)
        var = jnp.abs(1.0 + 0.1 * jax.random.normal(kv, (dout,), jnp.float32))
        raw.append((W, b, gamma, beta, mean, var))
    return raw


def block3_reference(x, raw, eps=1e-5):
    """Pure-JAX f32 reference matching the PyTorch module (BN in eval mode)."""
    h = x
    for (W, b, gamma, beta, mean, var) in raw:
        z = h @ W + b
        z = (z - mean) / jnp.sqrt(var + eps) * gamma + beta
        h = z * jax.nn.sigmoid(z)
    return h


if __name__ == "__main__":
    key = jax.random.PRNGKey(0)
    kx, kp, kx2 = jax.random.split(key, 3)

    B, D = 8, 32                          # batch=8, in_shape=32
    raw = make_params(kp, D)
    folded = fold_params(raw)

    x = jax.random.normal(kx, (B, D), jnp.float32)
    ref = block3_reference(x, raw)

    # f32 compute path (tighter structural check of padding/folding/tiling).
    out_f32 = jax.block_until_ready(
        block3_pallas(x, folded, compute_dtype=jnp.float32))
    assert out_f32.shape == (B, D)
    assert jnp.allclose(out_f32, ref, atol=5e-2, rtol=5e-2), \
        f"f32 path max abs err {float(jnp.max(jnp.abs(out_f32 - ref)))}"

    # Default bf16 compute path (MXU-rate weights/activations).
    out_bf16 = jax.block_until_ready(block3_pallas(x, folded))
    assert out_bf16.shape == (B, D)
    assert jnp.allclose(out_bf16, ref, atol=1e-1, rtol=1e-1), \
        f"bf16 path max abs err {float(jnp.max(jnp.abs(out_bf16 - ref)))}"

    # Larger batch exercises the multi-step 'parallel' grid (grid >= 2).
    B2 = 512
    x2 = jax.random.normal(kx2, (B2, D), jnp.float32)
    out2 = jax.block_until_ready(block3_pallas(x2, folded, tile_b=256))
    ref2 = block3_reference(x2, raw)
    assert out2.shape == (B2, D)
    assert jnp.allclose(out2, ref2, atol=1e-1, rtol=1e-1), \
        f"bf16 tiled path max abs err {float(jnp.max(jnp.abs(out2 - ref2)))}"

    print("KERNEL_OK")
</pallas_src>

<mosaic_0001>
module attributes {stable_mosaic.version = 11 : i64} {
  func.func @block3_kernel(%arg0: i32, %arg1: memref<8x128xf32, #tpu.memory_space<vmem>>, %arg2: memref<128x128xf32, #tpu.memory_space<vmem>>, %arg3: memref<128x128xf32, #tpu.memory_space<vmem>>, %arg4: memref<128x128xf32, #tpu.memory_space<vmem>>, %arg5: memref<128x128xf32, #tpu.memory_space<vmem>>, %arg6: memref<1x128xf32, #tpu.memory_space<vmem>>, %arg7: memref<1x128xf32, #tpu.memory_space<vmem>>, %arg8: memref<1x128xf32, #tpu.memory_space<vmem>>, %arg9: memref<1x128xf32, #tpu.memory_space<vmem>>, %arg10: memref<8x128xf32, #tpu.memory_space<vmem>>) attributes {dimension_semantics = [#tpu.dimension_semantics<parallel>], iteration_bounds = array<i64: 1>, scalar_prefetch = 0 : i64, scratch_operands = 0 : i64, tpu.core_type = #tpu.core_type<tc>, window_params = [{transform_indices = @transform_0, window_bounds = array<i64: 8, 128>}, {pipeline_mode = #tpu.pipeline_mode<synchronous>, transform_indices = @transform_1, window_bounds = array<i64: 128, 128>}, {pipeline_mode = #tpu.pipeline_mode<synchronous>, transform_indices = @transform_2, window_bounds = array<i64: 128, 128>}, {pipeline_mode = #tpu.pipeline_mode<synchronous>, transform_indices = @transform_3, window_bounds = array<i64: 128, 128>}, {pipeline_mode = #tpu.pipeline_mode<synchronous>, transform_indices = @transform_4, window_bounds = array<i64: 128, 128>}, {pipeline_mode = #tpu.pipeline_mode<synchronous>, transform_indices = @transform_5, window_bounds = array<i64: 1, 128>}, {pipeline_mode = #tpu.pipeline_mode<synchronous>, transform_indices = @transform_6, window_bounds = array<i64: 1, 128>}, {pipeline_mode = #tpu.pipeline_mode<synchronous>, transform_indices = @transform_7, window_bounds = array<i64: 1, 128>}, {pipeline_mode = #tpu.pipeline_mode<synchronous>, transform_indices = @transform_8, window_bounds = array<i64: 1, 128>}, {transform_indices = @transform_9, window_bounds = array<i64: 8, 128>}]} {
    %c0 = arith.constant 0 : index
    %c0_0 = arith.constant 0 : index
    %0 = vector.load %arg1[%c0, %c0_0] : memref<8x128xf32, #tpu.memory_space<vmem>>, vector<8x128xf32>
    %c0_1 = arith.constant 0 : index
    %c0_2 = arith.constant 0 : index
    %1 = vector.load %arg2[%c0_1, %c0_2] : memref<128x128xf32, #tpu.memory_space<vmem>>, vector<128x128xf32>
    %cst = arith.constant dense<0.000000e+00> : vector<8x128xf32>
    %2 = tpu.matmul %0, %1, %cst {dimension_numbers = #tpu.dot_dimension_numbers<[1], [0], [0], [1], [0, 0, 1, 1], [], []>} : vector<8x128xf32>, vector<128x128xf32>, vector<8x128xf32> -> vector<8x128xf32>
    %c0_3 = arith.constant 0 : index
    %c0_4 = arith.constant 0 : index
    %3 = vector.load %arg6[%c0_3, %c0_4] : memref<1x128xf32, #tpu.memory_space<vmem>>, vector<1x128xf32>
    %4 = vector.broadcast %3 : vector<1x128xf32> to vector<8x128xf32>
    %5 = arith.addf %2, %4 : vector<8x128xf32>
    %cst_5 = arith.constant 0.000000e+00 : f32
    %6 = vector.broadcast %cst_5 : f32 to vector<8x128xf32>
    %7 = arith.subf %6, %5 : vector<8x128xf32>
    %cst_6 = arith.constant 8.000000e+01 : f32
    %8 = vector.broadcast %cst_6 : f32 to vector<8x128xf32>
    %9 = arith.minimumf %7, %8 : vector<8x128xf32>
    %10 = math.exp %9 : vector<8x128xf32>
    %cst_7 = arith.constant 1.000000e+00 : f32
    %11 = vector.broadcast %cst_7 : f32 to vector<8x128xf32>
    %12 = arith.addf %11, %10 : vector<8x128xf32>
    %13 = tpu.reciprocal %12 {approx = true} : vector<8x128xf32> -> vector<8x128xf32>
    %14 = arith.mulf %5, %13 : vector<8x128xf32>
    %c0_8 = arith.constant 0 : index
    %c0_9 = arith.constant 0 : index
    %15 = vector.load %arg3[%c0_8, %c0_9] : memref<128x128xf32, #tpu.memory_space<vmem>>, vector<128x128xf32>
    %cst_10 = arith.constant dense<0.000000e+00> : vector<8x128xf32>
    %16 = tpu.matmul %14, %15, %cst_10 {dimension_numbers = #tpu.dot_dimension_numbers<[1], [0], [0], [1], [0, 0, 1, 1], [], []>} : vector<8x128xf32>, vector<128x128xf32>, vector<8x128xf32> -> vector<8x128xf32>
    %c0_11 = arith.constant 0 : index
    %c0_12 = arith.constant 0 : index
    %17 = vector.load %arg7[%c0_11, %c0_12] : memref<1x128xf32, #tpu.memory_space<vmem>>, vector<1x128xf32>
    %18 = vector.broadcast %17 : vector<1x128xf32> to vector<8x128xf32>
    %19 = arith.addf %16, %18 : vector<8x128xf32>
    %cst_13 = arith.constant 0.000000e+00 : f32
    %20 = vector.broadcast %cst_13 : f32 to vector<8x128xf32>
    %21 = arith.subf %20, %19 : vector<8x128xf32>
    %cst_14 = arith.constant 8.000000e+01 : f32
    %22 = vector.broadcast %cst_14 : f32 to vector<8x128xf32>
    %23 = arith.minimumf %21, %22 : vector<8x128xf32>
    %24 = math.exp %23 : vector<8x128xf32>
    %cst_15 = arith.constant 1.000000e+00 : f32
    %25 = vector.broadcast %cst_15 : f32 to vector<8x128xf32>
    %26 = arith.addf %25, %24 : vector<8x128xf32>
    %27 = tpu.reciprocal %26 {approx = true} : vector<8x128xf32> -> vector<8x128xf32>
    %28 = arith.mulf %19, %27 : vector<8x128xf32>
    %c0_16 = arith.constant 0 : index
    %c0_17 = arith.constant 0 : index
    %29 = vector.load %arg4[%c0_16, %c0_17] : memref<128x128xf32, #tpu.memory_space<vmem>>, vector<128x128xf32>
    %cst_18 = arith.constant dense<0.000000e+00> : vector<8x128xf32>
    %30 = tpu.matmul %28, %29, %cst_18 {dimension_numbers = #tpu.dot_dimension_numbers<[1], [0], [0], [1], [0, 0, 1, 1], [], []>} : vector<8x128xf32>, vector<128x128xf32>, vector<8x128xf32> -> vector<8x128xf32>
    %c0_19 = arith.constant 0 : index
    %c0_20 = arith.constant 0 : index
    %31 = vector.load %arg8[%c0_19, %c0_20] : memref<1x128xf32, #tpu.memory_space<vmem>>, vector<1x128xf32>
    %32 = vector.broadcast %31 : vector<1x128xf32> to vector<8x128xf32>
    %33 = arith.addf %30, %32 : vector<8x128xf32>
    %cst_21 = arith.constant 0.000000e+00 : f32
    %34 = vector.broadcast %cst_21 : f32 to vector<8x128xf32>
    %35 = arith.subf %34, %33 : vector<8x128xf32>
    %cst_22 = arith.constant 8.000000e+01 : f32
    %36 = vector.broadcast %cst_22 : f32 to vector<8x128xf32>
    %37 = arith.minimumf %35, %36 : vector<8x128xf32>
    %38 = math.exp %37 : vector<8x128xf32>
    %cst_23 = arith.constant 1.000000e+00 : f32
    %39 = vector.broadcast %cst_23 : f32 to vector<8x128xf32>
    %40 = arith.addf %39, %38 : vector<8x128xf32>
    %41 = tpu.reciprocal %40 {approx = true} : vector<8x128xf32> -> vector<8x128xf32>
    %42 = arith.mulf %33, %41 : vector<8x128xf32>
    %c0_24 = arith.constant 0 : index
    %c0_25 = arith.constant 0 : index
    %43 = vector.load %arg5[%c0_24, %c0_25] : memref<128x128xf32, #tpu.memory_space<vmem>>, vector<128x128xf32>
    %cst_26 = arith.constant dense<0.000000e+00> : vector<8x128xf32>
    %44 = tpu.matmul %42, %43, %cst_26 {dimension_numbers = #tpu.dot_dimension_numbers<[1], [0], [0], [1], [0, 0, 1, 1], [], []>} : vector<8x128xf32>, vector<128x128xf32>, vector<8x128xf32> -> vector<8x128xf32>
    %c0_27 = arith.constant 0 : index
    %c0_28 = arith.constant 0 : index
    %45 = vector.load %arg9[%c0_27, %c0_28] : memref<1x128xf32, #tpu.memory_space<vmem>>, vector<1x128xf32>
    %46 = vector.broadcast %45 : vector<1x128xf32> to vector<8x128xf32>
    %47 = arith.addf %44, %46 : vector<8x128xf32>
    %cst_29 = arith.constant 0.000000e+00 : f32
    %48 = vector.broadcast %cst_29 : f32 to vector<8x128xf32>
    %49 = arith.subf %48, %47 : vector<8x128xf32>
    %cst_30 = arith.constant 8.000000e+01 : f32
    %50 = vector.broadcast %cst_30 : f32 to vector<8x128xf32>
    %51 = arith.minimumf %49, %50 : vector<8x128xf32>
    %52 = math.exp %51 : vector<8x128xf32>
    %cst_31 = arith.constant 1.000000e+00 : f32
    %53 = vector.broadcast %cst_31 : f32 to vector<8x128xf32>
    %54 = arith.addf %53, %52 : vector<8x128xf32>
    %55 = tpu.reciprocal %54 {approx = true} : vector<8x128xf32> -> vector<8x128xf32>
    %56 = arith.mulf %47, %55 : vector<8x128xf32>
    %c0_32 = arith.constant 0 : index
    %c0_33 = arith.constant 0 : index
    %57 = vector.load %arg10[%c0_32, %c0_33] : memref<8x128xf32, #tpu.memory_space<vmem>>, vector<8x128xf32>
    tpu.vector_store %arg10[%c0_32, %c0_33], %56 {strides = array<i32>} : memref<8x128xf32, #tpu.memory_space<vmem>>, vector<8x128xf32>,
    return
  }
  func.func @transform_0(%arg0: i32) -> (i32, i32) {
    %c0_i32 = arith.constant 0 : i32
    %c0_i32_0 = arith.constant 0 : i32
    return %arg0, %c0_i32 : i32, i32
  }
  func.func @transform_1(%arg0: i32) -> (i32, i32) {
    %c0_i32 = arith.constant 0 : i32
    %c0_i32_0 = arith.constant 0 : i32
    %c0_i32_1 = arith.constant 0 : i32
    return %c0_i32, %c0_i32_0 : i32, i32
  }
  func.func @transform_2(%arg0: i32) -> (i32, i32) {
    %c0_i32 = arith.constant 0 : i32
    %c0_i32_0 = arith.constant 0 : i32
    %c0_i32_1 = arith.constant 0 : i32
    return %c0_i32, %c0_i32_0 : i32, i32
  }
  func.func @transform_3(%arg0: i32) -> (i32, i32) {
    %c0_i32 = arith.constant 0 : i32
    %c0_i32_0 = arith.constant 0 : i32
    %c0_i32_1 = arith.constant 0 : i32
    return %c0_i32, %c0_i32_0 : i32, i32
  }
  func.func @transform_4(%arg0: i32) -> (i32, i32) {
    %c0_i32 = arith.constant 0 : i32
    %c0_i32_0 = arith.constant 0 : i32
    %c0_i32_1 = arith.constant 0 : i32
    return %c0_i32, %c0_i32_0 : i32, i32
  }
  func.func @transform_5(%arg0: i32) -> (i32, i32) {
    %c0_i32 = arith.constant 0 : i32
    %c0_i32_0 = arith.constant 0 : i32
    %c0_i32_1 = arith.constant 0 : i32
    return %c0_i32, %c0_i32_0 : i32, i32
  }
  func.func @transform_6(%arg0: i32) -> (i32, i32) {
    %c0_i32 = arith.constant 0 : i32
    %c0_i32_0 = arith.constant 0 : i32
    %c0_i32_1 = arith.constant 0 : i32
    return %c0_i32, %c0_i32_0 : i32, i32
  }
  func.func @transform_7(%arg0: i32) -> (i32, i32) {
    %c0_i32 = arith.constant 0 : i32
    %c0_i32_0 = arith.constant 0 : i32
    %c0_i32_1 = arith.constant 0 : i32
    return %c0_i32, %c0_i32_0 : i32, i32
  }
  func.func @transform_8(%arg0: i32) -> (i32, i32) {
    %c0_i32 = arith.constant 0 : i32
    %c0_i32_0 = arith.constant 0 : i32
    %c0_i32_1 = arith.constant 0 : i32
    return %c0_i32, %c0_i32_0 : i32, i32
  }
  func.func @transform_9(%arg0: i32) -> (i32, i32) {
    %c0_i32 = arith.constant 0 : i32
    %c0_i32_0 = arith.constant 0 : i32
    return %arg0, %c0_i32 : i32, i32
  }
}

module attributes {stable_mosaic.version = 11 : i64} {
  func.func @block3_kernel(%arg0: i32, %arg1: memref<8x128xf32, #tpu.memory_space<vmem>>, %arg2: memref<128x128xf32, #tpu.memory_space<vmem>>, %arg3: memref<128x128xf32, #tpu.memory_space<vmem>>, %arg4: memref<128x128xf32, #tpu.memory_space<vmem>>, %arg5: memref<128x128xf32, #tpu.memory_space<vmem>>, %arg6: memref<1x128xf32, #tpu.memory_space<vmem>>, %arg7: memref<1x128xf32, #tpu.memory_space<vmem>>, %arg8: memref<1x128xf32, #tpu.memory_space<vmem>>, %arg9: memref<1x128xf32, #tpu.memory_space<vmem>>, %arg10: memref<8x128xf32, #tpu.memory_space<vmem>>) attributes {dimension_semantics = [#tpu.dimension_semantics<parallel>], iteration_bounds = array<i64: 1>, scalar_prefetch = 0 : i64, scratch_operands = 0 : i64, tpu.core_type = #tpu.core_type<tc>, window_params = [{transform_indices = @transform_0, window_bounds = array<i64: 8, 128>}, {pipeline_mode = #tpu.pipeline_mode<synchronous>, transform_indices = @transform_1, window_bounds = array<i64: 128, 128>}, {pipeline_mode = #tpu.pipeline_mode<synchronous>, transform_indices = @transform_2, window_bounds = array<i64: 128, 128>}, {pipeline_mode = #tpu.pipeline_mode<synchronous>, transform_indices = @transform_3, window_bounds = array<i64: 128, 128>}, {pipeline_mode = #tpu.pipeline_mode<synchronous>, transform_indices = @transform_4, window_bounds = array<i64: 128, 128>}, {pipeline_mode = #tpu.pipeline_mode<synchronous>, transform_indices = @transform_5, window_bounds = array<i64: 1, 128>}, {pipeline_mode = #tpu.pipeline_mode<synchronous>, transform_indices = @transform_6, window_bounds = array<i64: 1, 128>}, {pipeline_mode = #tpu.pipeline_mode<synchronous>, transform_indices = @transform_7, window_bounds = array<i64: 1, 128>}, {pipeline_mode = #tpu.pipeline_mode<synchronous>, transform_indices = @transform_8, window_bounds = array<i64: 1, 128>}, {transform_indices = @transform_9, window_bounds = array<i64: 8, 128>}]} {
    %c0 = arith.constant 0 : index
    %c0_0 = arith.constant 0 : index
    %0 = vector.load %arg1[%c0, %c0_0] : memref<8x128xf32, #tpu.memory_space<vmem>>, vector<8x128xf32>
    %c0_1 = arith.constant 0 : index
    %c0_2 = arith.constant 0 : index
    %1 = vector.load %arg2[%c0_1, %c0_2] : memref<128x128xf32, #tpu.memory_space<vmem>>, vector<128x128xf32>
    %cst = arith.constant dense<0.000000e+00> : vector<8x128xf32>
    %2 = tpu.matmul %0, %1, %cst {dimension_numbers = #tpu.dot_dimension_numbers<[1], [0], [0], [1], [0, 0, 1, 1], [], []>} : vector<8x128xf32>, vector<128x128xf32>, vector<8x128xf32> -> vector<8x128xf32>
    %c0_3 = arith.constant 0 : index
    %c0_4 = arith.constant 0 : index
    %3 = vector.load %arg6[%c0_3, %c0_4] : memref<1x128xf32, #tpu.memory_space<vmem>>, vector<1x128xf32>
    %4 = vector.broadcast %3 : vector<1x128xf32> to vector<8x128xf32>
    %5 = arith.addf %2, %4 : vector<8x128xf32>
    %cst_5 = arith.constant 0.000000e+00 : f32
    %6 = vector.broadcast %cst_5 : f32 to vector<8x128xf32>
    %7 = arith.subf %6, %5 : vector<8x128xf32>
    %cst_6 = arith.constant 8.000000e+01 : f32
    %8 = vector.broadcast %cst_6 : f32 to vector<8x128xf32>
    %9 = arith.minimumf %7, %8 : vector<8x128xf32>
    %10 = math.exp %9 : vector<8x128xf32>
    %cst_7 = arith.constant 1.000000e+00 : f32
    %11 = vector.broadcast %cst_7 : f32 to vector<8x128xf32>
    %12 = arith.addf %11, %10 : vector<8x128xf32>
    %13 = tpu.reciprocal %12 {approx = true} : vector<8x128xf32> -> vector<8x128xf32>
    %14 = arith.mulf %5, %13 : vector<8x128xf32>
    %c0_8 = arith.constant 0 : index
    %c0_9 = arith.constant 0 : index
    %15 = vector.load %arg3[%c0_8, %c0_9] : memref<128x128xf32, #tpu.memory_space<vmem>>, vector<128x128xf32>
    %cst_10 = arith.constant dense<0.000000e+00> : vector<8x128xf32>
    %16 = tpu.matmul %14, %15, %cst_10 {dimension_numbers = #tpu.dot_dimension_numbers<[1], [0], [0], [1], [0, 0, 1, 1], [], []>} : vector<8x128xf32>, vector<128x128xf32>, vector<8x128xf32> -> vector<8x128xf32>
    %c0_11 = arith.constant 0 : index
    %c0_12 = arith.constant 0 : index
    %17 = vector.load %arg7[%c0_11, %c0_12] : memref<1x128xf32, #tpu.memory_space<vmem>>, vector<1x128xf32>
    %18 = vector.broadcast %17 : vector<1x128xf32> to vector<8x128xf32>
    %19 = arith.addf %16, %18 : vector<8x128xf32>
    %cst_13 = arith.constant 0.000000e+00 : f32
    %20 = vector.broadcast %cst_13 : f32 to vector<8x128xf32>
    %21 = arith.subf %20, %19 : vector<8x128xf32>
    %cst_14 = arith.constant 8.000000e+01 : f32
    %22 = vector.broadcast %cst_14 : f32 to vector<8x128xf32>
    %23 = arith.minimumf %21, %22 : vector<8x128xf32>
    %24 = math.exp %23 : vector<8x128xf32>
    %cst_15 = arith.constant 1.000000e+00 : f32
    %25 = vector.broadcast %cst_15 : f32 to vector<8x128xf32>
    %26 = arith.addf %25, %24 : vector<8x128xf32>
    %27 = tpu.reciprocal %26 {approx = true} : vector<8x128xf32> -> vector<8x128xf32>
    %28 = arith.mulf %19, %27 : vector<8x128xf32>
    %c0_16 = arith.constant 0 : index
    %c0_17 = arith.constant 0 : index
    %29 = vector.load %arg4[%c0_16, %c0_17] : memref<128x128xf32, #tpu.memory_space<vmem>>, vector<128x128xf32>
    %cst_18 = arith.constant dense<0.000000e+00> : vector<8x128xf32>
    %30 = tpu.matmul %28, %29, %cst_18 {dimension_numbers = #tpu.dot_dimension_numbers<[1], [0], [0], [1], [0, 0, 1, 1], [], []>} : vector<8x128xf32>, vector<128x128xf32>, vector<8x128xf32> -> vector<8x128xf32>
    %c0_19 = arith.constant 0 : index
    %c0_20 = arith.constant 0 : index
    %31 = vector.load %arg8[%c0_19, %c0_20] : memref<1x128xf32, #tpu.memory_space<vmem>>, vector<1x128xf32>
    %32 = vector.broadcast %31 : vector<1x128xf32> to vector<8x128xf32>
    %33 = arith.addf %30, %32 : vector<8x128xf32>
    %cst_21 = arith.constant 0.000000e+00 : f32
    %34 = vector.broadcast %cst_21 : f32 to vector<8x128xf32>
    %35 = arith.subf %34, %33 : vector<8x128xf32>
    %cst_22 = arith.constant 8.000000e+01 : f32
    %36 = vector.broadcast %cst_22 : f32 to vector<8x128xf32>
    %37 = arith.minimumf %35, %36 : vector<8x128xf32>
    %38 = math.exp %37 : vector<8x128xf32>
    %cst_23 = arith.constant 1.000000e+00 : f32
    %39 = vector.broadcast %cst_23 : f32 to vector<8x128xf32>
    %40 = arith.addf %39, %38 : vector<8x128xf32>
    %41 = tpu.reciprocal %40 {approx = true} : vector<8x128xf32> -> vector<8x128xf32>
    %42 = arith.mulf %33, %41 : vector<8x128xf32>
    %c0_24 = arith.constant 0 : index
    %c0_25 = arith.constant 0 : index
    %43 = vector.load %arg5[%c0_24, %c0_25] : memref<128x128xf32, #tpu.memory_space<vmem>>, vector<128x128xf32>
    %cst_26 = arith.constant dense<0.000000e+00> : vector<8x128xf32>
    %44 = tpu.matmul %42, %43, %cst_26 {dimension_numbers = #tpu.dot_dimension_numbers<[1], [0], [0], [1], [0, 0, 1, 1], [], []>} : vector<8x128xf32>, vector<128x128xf32>, vector<8x128xf32> -> vector<8x128xf32>
    %c0_27 = arith.constant 0 : index
    %c0_28 = arith.constant 0 : index
    %45 = vector.load %arg9[%c0_27, %c0_28] : memref<1x128xf32, #tpu.memory_space<vmem>>, vector<1x128xf32>
    %46 = vector.broadcast %45 : vector<1x128xf32> to vector<8x128xf32>
    %47 = arith.addf %44, %46 : vector<8x128xf32>
    %cst_29 = arith.constant 0.000000e+00 : f32
    %48 = vector.broadcast %cst_29 : f32 to vector<8x128xf32>
    %49 = arith.subf %48, %47 : vector<8x128xf32>
    %cst_30 = arith.constant 8.000000e+01 : f32
    %50 = vector.broadcast %cst_30 : f32 to vector<8x128xf32>
    %51 = arith.minimumf %49, %50 : vector<8x128xf32>
    %52 = math.exp %51 : vector<8x128xf32>
    %cst_31 = arith.constant 1.000000e+00 : f32
    %53 = vector.broadcast %cst_31 : f32 to vector<8x128xf32>
    %54 = arith.addf %53, %52 : vector<8x128xf32>
    %55 = tpu.reciprocal %54 {approx = true} : vector<8x128xf32> -> vector<8x128xf32>
    %56 = arith.mulf %47, %55 : vector<8x128xf32>
    %c0_32 = arith.constant 0 : index
    %c0_33 = arith.constant 0 : index
    %57 = vector.load %arg10[%c0_32, %c0_33] : memref<8x128xf32, #tpu.memory_space<vmem>>, vector<8x128xf32>
    tpu.vector_store %arg10[%c0_32, %c0_33], %56 {strides = array<i32>} : memref<8x128xf32, #tpu.memory_space<vmem>>, vector<8x128xf32>,
    return
  }
  func.func @transform_0(%arg0: i32) -> (i32, i32) {
    %c0_i32 = arith.constant 0 : i32
    %c0_i32_0 = arith.constant 0 : i32
    return %arg0, %c0_i32 : i32, i32
  }
  func.func @transform_1(%arg0: i32) -> (i32, i32) {
    %c0_i32 = arith.constant 0 : i32
    %c0_i32_0 = arith.constant 0 : i32
    %c0_i32_1 = arith.constant 0 : i32
    return %c0_i32, %c0_i32_0 : i32, i32
  }
  func.func @transform_2(%arg0: i32) -> (i32, i32) {
    %c0_i32 = arith.constant 0 : i32
    %c0_i32_0 = arith.constant 0 : i32
    %c0_i32_1 = arith.constant 0 : i32
    return %c0_i32, %c0_i32_0 : i32, i32
  }
  func.func @transform_3(%arg0: i32) -> (i32, i32) {
    %c0_i32 = arith.constant 0 : i32
    %c0_i32_0 = arith.constant 0 : i32
    %c0_i32_1 = arith.constant 0 : i32
    return %c0_i32, %c0_i32_0 : i32, i32
  }
  func.func @transform_4(%arg0: i32) -> (i32, i32) {
    %c0_i32 = arith.constant 0 : i32
    %c0_i32_0 = arith.constant 0 : i32
    %c0_i32_1 = arith.constant 0 : i32
    return %c0_i32, %c0_i32_0 : i32, i32
  }
  func.func @transform_5(%arg0: i32) -> (i32, i32) {
    %c0_i32 = arith.constant 0 : i32
    %c0_i32_0 = arith.constant 0 : i32
    %c0_i32_1 = arith.constant 0 : i32
    return %c0_i32, %c0_i32_0 : i32, i32
  }
  func.func @transform_6(%arg0: i32) -> (i32, i32) {
    %c0_i32 = arith.constant 0 : i32
    %c0_i32_0 = arith.constant 0 : i32
    %c0_i32_1 = arith.constant 0 : i32
    return %c0_i32, %c0_i32_0 : i32, i32
  }
  func.func @transform_7(%arg0: i32) -> (i32, i32) {
    %c0_i32 = arith.constant 0 : i32
    %c0_i32_0 = arith.constant 0 : i32
    %c0_i32_1 = arith.constant 0 : i32
    return %c0_i32, %c0_i32_0 : i32, i32
  }
  func.func @transform_8(%arg0: i32) -> (i32, i32) {
    %c0_i32 = arith.constant 0 : i32
    %c0_i32_0 = arith.constant 0 : i32
    %c0_i32_1 = arith.constant 0 : i32
    return %c0_i32, %c0_i32_0 : i32, i32
  }
  func.func @transform_9(%arg0: i32) -> (i32, i32) {
    %c0_i32 = arith.constant 0 : i32
    %c0_i32_0 = arith.constant 0 : i32
    return %arg0, %c0_i32 : i32, i32
  }
}

</mosaic_0001>

<llo_original>
// kernel: tpu_custom_call.1
$region0: #{tpu_custom_call.1}
  #allocation0 [shape = 'u32[]', space=smem, size = 0x4, offset = 0x4, fixed_abs, tag = 'smem constant byte address 0x4 - core index']
  #allocation1 [shape = 'u32[144,128]{1,0:T(1,128)}', space=vmem, size = 0x12000, scoped, tag = 'internal scratch']
  %s0 = inlined_call_operand.hbm [shape: f32[8,128], index: 0, kind: input, shape index: {}]
  %s1 = inlined_call_operand.hbm [shape: f32[128,128], index: 1, kind: input, shape index: {}]
  %s2 = inlined_call_operand.hbm [shape: f32[128,128], index: 2, kind: input, shape index: {}]
  %s3 = inlined_call_operand.hbm [shape: f32[128,128], index: 3, kind: input, shape index: {}]
  %s4 = inlined_call_operand.hbm [shape: f32[128,128], index: 4, kind: input, shape index: {}]
  %s5 = inlined_call_operand.vmem [shape: f32[1,128], index: 5, kind: input, shape index: {}]
  %s6 = inlined_call_operand.vmem [shape: f32[1,128], index: 6, kind: input, shape index: {}]
  %s7 = inlined_call_operand.vmem [shape: f32[1,128], index: 7, kind: input, shape index: {}]
  %s8 = inlined_call_operand.vmem [shape: f32[1,128], index: 8, kind: input, shape index: {}]
  %s9 = inlined_call_operand.hbm [shape: f32[8,128], index: 9, kind: output, shape index: {}]
  %s10 = sld [smem:[#allocation0]]
  $region66: #{tpu_custom_call.1} parent=0
    _
  %s12 = ssub.s32 1, %s10
  %s13 = scalar_select 0, %s12, %s10
  $region1: #{tpu_custom_call.1} parent=0
    #allocation2 [shape = 'u8[4096]{0}', space=vmem, size = 0x1000, scoped, tag = 'input window, operand 0, single buffered']
    #allocation3 [shape = 's32[1]{0}', space=sflag, size = 0x4, scoped, tag = 'scoped memory for tpu_custom_call.1']
    #allocation4 [shape = 's32[1]{0}', space=sflag, size = 0x4, scoped, tag = 'scoped memory for tpu_custom_call.1']
    #allocation5 [shape = 'u8[65536]{0}', space=vmem, size = 0x10000, scoped, tag = 'input window, operand 1, single buffered']
    #allocation6 [shape = 's32[1]{0}', space=sflag, size = 0x4, scoped, tag = 'scoped memory for tpu_custom_call.1']
    #allocation7 [shape = 'u8[65536]{0}', space=vmem, size = 0x10000, scoped, tag = 'input window, operand 2, single buffered']
    #allocation8 [shape = 'u8[65536]{0}', space=vmem, size = 0x10000, scoped, tag = 'input window, operand 3, single buffered']
    #allocation9 [shape = 's32[1]{0}', space=sflag, size = 0x4, scoped, tag = 'scoped memory for tpu_custom_call.1']
    #allocation10 [shape = 'u8[65536]{0}', space=vmem, size = 0x10000, scoped, tag = 'input window, operand 4, single buffered']
    #allocation11 [shape = 'u8[4096]{0}', space=vmem, size = 0x1000, scoped, tag = 'output window, operand 0, single buffered']
    %14 = vsyncpa [#allocation3], 0
    %15 = vsyncpa [#allocation6], 0
    %16 = vsyncpa [#allocation9], 0
    %17 = vsyncpa [#allocation4], 0
    // Predicated region
    $region2: #{tpu_custom_call.1} parent=1 // pred_check
      _
    $region3: #{tpu_custom_call.1} parent=1 // pred_check_branch
      %19 = sbr.rel (0) target = $region5
    $region4: #{tpu_custom_call.1} parent=1 // pred_region
      %s21 = ssub.s32 128, 128
      %22 = vsyncadd [#allocation3], %s21
      %s24 = sshll.u32 [#allocation2], 4
      %s25 = int_to_ptr.vmem [resolvable:$true] %s24
      %27 = dma.hbm_to_vmem [thread:$0]  %s0, 128, %s25, [#allocation3]
    $region5: #{tpu_custom_call.1} parent=1 // pred_fallthru
      _
    // Predicated region
    $region6: #{tpu_custom_call.1} parent=1 // pred_check
      _
    $region7: #{tpu_custom_call.1} parent=1 // pred_check_branch
      %29 = sbr.rel (0) target = $region9
    $region8: #{tpu_custom_call.1} parent=1 // pred_region
      %s31 = ssub.s32 2048, 2048
      %32 = vsyncadd [#allocation6], %s31
      %s33 = sshll.u32 [#allocation5], 4
      %s34 = int_to_ptr.vmem [resolvable:$true] %s33
      %39 = dma.hbm_to_vmem [thread:$0]  %s1, 2048, %s34, [#allocation6], 128, 128, 8
    $region9: #{tpu_custom_call.1} parent=1 // pred_fallthru
      _
    // Predicated region
    $region10: #{tpu_custom_call.1} parent=1 // pred_check
      _
    $region11: #{tpu_custom_call.1} parent=1 // pred_check_branch
      %41 = sbr.rel (0) target = $region13
    $region12: #{tpu_custom_call.1} parent=1 // pred_region
      %s43 = ssub.s32 2048, 2048
      %44 = vsyncadd [#allocation6], %s43
      %s45 = sshll.u32 [#allocation7], 4
      %s46 = int_to_ptr.vmem [resolvable:$true] %s45
      %51 = dma.hbm_to_vmem [thread:$0]  %s2, 2048, %s46, [#allocation6], 128, 128, 8
    $region13: #{tpu_custom_call.1} parent=1 // pred_fallthru
      _
    // Predicated region
    $region14: #{tpu_custom_call.1} parent=1 // pred_check
      _
    $region15: #{tpu_custom_call.1} parent=1 // pred_check_branch
      %53 = sbr.rel (0) target = $region17
    $region16: #{tpu_custom_call.1} parent=1 // pred_region
      %s55 = ssub.s32 2048, 2048
      %56 = vsyncadd [#allocation9], %s55
      %s57 = sshll.u32 [#allocation8], 4
      %s58 = int_to_ptr.vmem [resolvable:$true] %s57
      %63 = dma.hbm_to_vmem [thread:$0]  %s3, 2048, %s58, [#allocation9], 128, 128, 8
    $region17: #{tpu_custom_call.1} parent=1 // pred_fallthru
      _
    // Predicated region
    $region18: #{tpu_custom_call.1} parent=1 // pred_check
      _
    $region19: #{tpu_custom_call.1} parent=1 // pred_check_branch
      %65 = sbr.rel (0) target = $region21
    $region20: #{tpu_custom_call.1} parent=1 // pred_region
      %s67 = ssub.s32 2048, 2048
      %68 = vsyncadd [#allocation9], %s67
      %s69 = sshll.u32 [#allocation10], 4
      %s70 = int_to_ptr.vmem [resolvable:$true] %s69
      %75 = dma.hbm_to_vmem [thread:$0]  %s4, 2048, %s70, [#allocation9], 128, 128, 8
    $region21: #{tpu_custom_call.1} parent=1 // pred_fallthru
      _
    // Predicated region
    $region22: #{tpu_custom_call.1} parent=1 // pred_check
      _
    $region23: #{tpu_custom_call.1} parent=1 // pred_check_branch
      %77 = sbr.rel (0) target = $region25
    $region24: #{tpu_custom_call.1} parent=1 // pred_region
      _
    $region25: #{tpu_custom_call.1} parent=1 // pred_fallthru
      _
    // Predicated region
    $region26: #{tpu_custom_call.1} parent=1 // pred_check
      _
    $region27: #{tpu_custom_call.1} parent=1 // pred_check_branch
      %79 = sbr.rel (0) target = $region29
    $region28: #{tpu_custom_call.1} parent=1 // pred_region
      _
    $region29: #{tpu_custom_call.1} parent=1 // pred_fallthru
      _
    // Predicated region
    $region30: #{tpu_custom_call.1} parent=1 // pred_check
      _
    $region31: #{tpu_custom_call.1} parent=1 // pred_check_branch
      %81 = sbr.rel (0) target = $region33
    $region32: #{tpu_custom_call.1} parent=1 // pred_region
      _
    $region33: #{tpu_custom_call.1} parent=1 // pred_fallthru
      _
    // Predicated region
    $region34: #{tpu_custom_call.1} parent=1 // pred_check
      _
    $region35: #{tpu_custom_call.1} parent=1 // pred_check_branch
      %83 = sbr.rel (0) target = $region37
    $region36: #{tpu_custom_call.1} parent=1 // pred_region
      _
    $region37: #{tpu_custom_call.1} parent=1 // pred_fallthru
      _
    // Predicated region
    $region38: #{tpu_custom_call.1} parent=1 // pred_check
      _
    $region39: #{tpu_custom_call.1} parent=1 // pred_check_branch
      %85 = sbr.rel (0) target = $region41
    $region40: #{tpu_custom_call.1} parent=1 // pred_region
      %86 = dma.done [#allocation3], 128
    $region41: #{tpu_custom_call.1} parent=1 // pred_fallthru
      _
    // Predicated region
    $region42: #{tpu_custom_call.1} parent=1 // pred_check
      _
    $region43: #{tpu_custom_call.1} parent=1 // pred_check_branch
      %88 = sbr.rel (0) target = $region45
    $region44: #{tpu_custom_call.1} parent=1 // pred_region
      %89 = dma.done [#allocation6], 2048
    $region45: #{tpu_custom_call.1} parent=1 // pred_fallthru
      _
    // Predicated region
    $region46: #{tpu_custom_call.1} parent=1 // pred_check
      _
    $region47: #{tpu_custom_call.1} parent=1 // pred_check_branch
      %91 = sbr.rel (0) target = $region49
    $region48: #{tpu_custom_call.1} parent=1 // pred_region
      %92 = dma.done [#allocation6], 2048
    $region49: #{tpu_custom_call.1} parent=1 // pred_fallthru
      _
    // Predicated region
    $region50: #{tpu_custom_call.1} parent=1 // pred_check
      _
    $region51: #{tpu_custom_call.1} parent=1 // pred_check_branch
      %94 = sbr.rel (0) target = $region53
    $region52: #{tpu_custom_call.1} parent=1 // pred_region
      %95 = dma.done [#allocation9], 2048
    $region53: #{tpu_custom_call.1} parent=1 // pred_fallthru
      _
    // Predicated region
    $region54: #{tpu_custom_call.1} parent=1 // pred_check
      _
    $region55: #{tpu_custom_call.1} parent=1 // pred_check_branch
      %97 = sbr.rel (0) target = $region57
    $region56: #{tpu_custom_call.1} parent=1 // pred_region
      %98 = dma.done [#allocation9], 2048
    $region57: #{tpu_custom_call.1} parent=1 // pred_fallthru
      _
    %v99 = vld [vmem:[#allocation2] sm:$0xff]
    %v100 = vld [vmem:[#allocation5] sm:$0xff]
    %v101 = vld [vmem:[#allocation5 + $0x8] sm:$0xff]
    %v102 = vld [vmem:[#allocation5 + $0x10] sm:$0xff]
    %v103 = vld [vmem:[#allocation5 + $0x18] sm:$0xff]
    %v104 = vld [vmem:[#allocation5 + $0x20] sm:$0xff]
    %v105 = vld [vmem:[#allocation5 + $0x28] sm:$0xff]
    %v106 = vld [vmem:[#allocation5 + $0x30] sm:$0xff]
    %v107 = vld [vmem:[#allocation5 + $0x38] sm:$0xff]
    %v108 = vld [vmem:[#allocation5 + $0x40] sm:$0xff]
    %v109 = vld [vmem:[#allocation5 + $0x48] sm:$0xff]
    %v110 = vld [vmem:[#allocation5 + $0x50] sm:$0xff]
    %v111 = vld [vmem:[#allocation5 + $0x58] sm:$0xff]
    %v112 = vld [vmem:[#allocation5 + $0x60] sm:$0xff]
    %v113 = vld [vmem:[#allocation5 + $0x68] sm:$0xff]
    %v114 = vld [vmem:[#allocation5 + $0x70] sm:$0xff]
    %v115 = vld [vmem:[#allocation5 + $0x78] sm:$0xff]
    %v116 = vld [vmem:[%s5] sm:$0x1]
    %v118 = vlaneseq
    %v119 = vshrl.u32 %v118, 7
    %v120 = vsub.s32 0, %v119
    %v121 = vrot.slane %v116, %v120
    %123 = vmatprep.subr.mxu0 0.0
    %124 = vmatpush1.msra.mxu0 %v100
    %125 = vmatprep.subr.mxu0 0.0
    %126 = vmatpush1.msra.mxu0 %v101
    %127 = vmatprep.subr.mxu0 0.0
    %128 = vmatpush1.msra.mxu0 %v102
    %129 = vmatprep.subr.mxu0 0.0
    %130 = vmatpush1.msra.mxu0 %v103
    %131 = vmatprep.subr.mxu0 0.0
    %132 = vmatpush1.msra.mxu0 %v104
    %133 = vmatprep.subr.mxu0 0.0
    %134 = vmatpush1.msra.mxu0 %v105
    %135 = vmatprep.subr.mxu0 0.0
    %136 = vmatpush1.msra.mxu0 %v106
    %137 = vmatprep.subr.mxu0 0.0
    %138 = vmatpush1.msra.mxu0 %v107
    %139 = vmatprep.subr.mxu0 0.0
    %140 = vmatpush1.msra.mxu0 %v108
    %141 = vmatprep.subr.mxu0 0.0
    %142 = vmatpush1.msra.mxu0 %v109
    %143 = vmatprep.subr.mxu0 0.0
    %144 = vmatpush1.msra.mxu0 %v110
    %145 = vmatprep.subr.mxu0 0.0
    %146 = vmatpush1.msra.mxu0 %v111
    %147 = vmatprep.subr.mxu0 0.0
    %148 = vmatpush1.msra.mxu0 %v112
    %149 = vmatprep.subr.mxu0 0.0
    %150 = vmatpush1.msra.mxu0 %v113
    %151 = vmatprep.subr.mxu0 0.0
    %152 = vmatpush1.msra.mxu0 %v114
    %153 = vmatprep.subr.mxu0 0.0
    %154 = vmatpush1.msra.mxu0 %v115
    %155 = vmatprep.subr.mxu0 0.0
    %156 = vmatpush1.msra.mxu0 0.0
    %157 = vmatprep.subr.mxu0 0.0
    %158 = vmatpush1.msra.mxu0 0.0
    %159 = vmatprep.subr.mxu0 0.0
    %160 = vmatpush1.msra.mxu0 0.0
    %161 = vmatprep.subr.mxu0 0.0
    %162 = vmatpush1.msra.mxu0 0.0
    %163 = vmatprep.subr.mxu0 0.0
    %164 = vmatpush1.msra.mxu0 0.0
    %165 = vmatprep.subr.mxu0 0.0
    %166 = vmatpush1.msra.mxu0 0.0
    %167 = vmatprep.subr.mxu0 0.0
    %168 = vmatpush1.msra.mxu0 0.0
    %169 = vmatprep.subr.mxu0 0.0
    %170 = vmatpush1.msra.mxu0 0.0
    %171 = vmatprep.subr.mxu0 0.0
    %172 = vmatpush1.msra.mxu0 0.0
    %173 = vmatprep.subr.mxu0 0.0
    %174 = vmatpush1.msra.mxu0 0.0
    %175 = vmatprep.subr.mxu0 0.0
    %176 = vmatpush1.msra.mxu0 0.0
    %177 = vmatprep.subr.mxu0 0.0
    %178 = vmatpush1.msra.mxu0 0.0
    %179 = vmatprep.subr.mxu0 0.0
    %180 = vmatpush1.msra.mxu0 0.0
    %181 = vmatprep.subr.mxu0 0.0
    %182 = vmatpush1.msra.mxu0 0.0
    %183 = vmatprep.subr.mxu0 0.0
    %184 = vmatpush1.msra.mxu0 0.0
    %185 = vmatprep.subr.mxu0 0.0
    %186 = vmatpush1.msra.mxu0 0.0
    %187 = vmatprep.mubr.f32.mxu0 0.0
    %188 = vmatmul.mubr.f32.gmra.mrb[0].mxu0 %v99
    %v189 = vpop.f32.mrb[0].mxu0
    %v190 = vadd.f32 %v121, %v189
    %v191 = vpop.f32.mrb[0].mxu0
    %192 = vdwg.mxu0
    %v193 = vsub.f32 0.0, %v190
    %v194 = vmin.f32 %v193, 80.0
    %v195 = vmul.f32 %v194, 1.442695
    %v196 = vpow.pop %v195
    %v197 = vadd.f32 %v196, 1.0
    %v198 = vrcp.pop %v197
    %v199 = vmul.f32 %v190, %v198
    %v200 = vld [vmem:[#allocation7] sm:$0xff]
    %v201 = vld [vmem:[#allocation7 + $0x8] sm:$0xff]
    %v202 = vld [vmem:[#allocation7 + $0x10] sm:$0xff]
    %v203 = vld [vmem:[#allocation7 + $0x18] sm:$0xff]
    %v204 = vld [vmem:[#allocation7 + $0x20] sm:$0xff]
    %v205 = vld [vmem:[#allocation7 + $0x28] sm:$0xff]
    %v206 = vld [vmem:[#allocation7 + $0x30] sm:$0xff]
    %v207 = vld [vmem:[#allocation7 + $0x38] sm:$0xff]
    %v208 = vld [vmem:[#allocation7 + $0x40] sm:$0xff]
    %v209 = vld [vmem:[#allocation7 + $0x48] sm:$0xff]
    %v210 = vld [vmem:[#allocation7 + $0x50] sm:$0xff]
    %v211 = vld [vmem:[#allocation7 + $0x58] sm:$0xff]
    %v212 = vld [vmem:[#allocation7 + $0x60] sm:$0xff]
    %v213 = vld [vmem:[#allocation7 + $0x68] sm:$0xff]
    %v214 = vld [vmem:[#allocation7 + $0x70] sm:$0xff]
    %v215 = vld [vmem:[#allocation7 + $0x78] sm:$0xff]
    %v216 = vld [vmem:[%s6] sm:$0x1]
    %v218 = vlaneseq
    %v219 = vshrl.u32 %v218, 7
    %v220 = vsub.s32 0, %v219
    %v221 = vrot.slane %v216, %v220
    %223 = vmatprep.subr.mxu0 0.0
    %224 = vmatpush1.msra.mxu0 %v200
    %225 = vmatprep.subr.mxu0 0.0
    %226 = vmatpush1.msra.mxu0 %v201
    %227 = vmatprep.subr.mxu0 0.0
    %228 = vmatpush1.msra.mxu0 %v202
    %229 = vmatprep.subr.mxu0 0.0
    %230 = vmatpush1.msra.mxu0 %v203
    %231 = vmatprep.subr.mxu0 0.0
    %232 = vmatpush1.msra.mxu0 %v204
    %233 = vmatprep.subr.mxu0 0.0
    %234 = vmatpush1.msra.mxu0 %v205
    %235 = vmatprep.subr.mxu0 0.0
    %236 = vmatpush1.msra.mxu0 %v206
    %237 = vmatprep.subr.mxu0 0.0
    %238 = vmatpush1.msra.mxu0 %v207
    %239 = vmatprep.subr.mxu0 0.0
    %240 = vmatpush1.msra.mxu0 %v208
    %241 = vmatprep.subr.mxu0 0.0
    %242 = vmatpush1.msra.mxu0 %v209
    %243 = vmatprep.subr.mxu0 0.0
    %244 = vmatpush1.msra.mxu0 %v210
    %245 = vmatprep.subr.mxu0 0.0
    %246 = vmatpush1.msra.mxu0 %v211
    %247 = vmatprep.subr.mxu0 0.0
    %248 = vmatpush1.msra.mxu0 %v212
    %249 = vmatprep.subr.mxu0 0.0
    %250 = vmatpush1.msra.mxu0 %v213
    %251 = vmatprep.subr.mxu0 0.0
    %252 = vmatpush1.msra.mxu0 %v214
    %253 = vmatprep.subr.mxu0 0.0
    %254 = vmatpush1.msra.mxu0 %v215
    %255 = vmatprep.subr.mxu0 0.0
    %256 = vmatpush1.msra.mxu0 0.0
    %257 = vmatprep.subr.mxu0 0.0
    %258 = vmatpush1.msra.mxu0 0.0
    %259 = vmatprep.subr.mxu0 0.0
    %260 = vmatpush1.msra.mxu0 0.0
    %261 = vmatprep.subr.mxu0 0.0
    %262 = vmatpush1.msra.mxu0 0.0
    %263 = vmatprep.subr.mxu0 0.0
    %264 = vmatpush1.msra.mxu0 0.0
    %265 = vmatprep.subr.mxu0 0.0
    %266 = vmatpush1.msra.mxu0 0.0
    %267 = vmatprep.subr.mxu0 0.0
    %268 = vmatpush1.msra.mxu0 0.0
    %269 = vmatprep.subr.mxu0 0.0
    %270 = vmatpush1.msra.mxu0 0.0
    %271 = vmatprep.subr.mxu0 0.0
    %272 = vmatpush1.msra.mxu0 0.0
    %273 = vmatprep.subr.mxu0 0.0
    %274 = vmatpush1.msra.mxu0 0.0
    %275 = vmatprep.subr.mxu0 0.0
    %276 = vmatpush1.msra.mxu0 0.0
    %277 = vmatprep.subr.mxu0 0.0
    %278 = vmatpush1.msra.mxu0 0.0
    %279 = vmatprep.subr.mxu0 0.0
    %280 = vmatpush1.msra.mxu0 0.0
    %281 = vmatprep.subr.mxu0 0.0
    %282 = vmatpush1.msra.mxu0 0.0
    %283 = vmatprep.subr.mxu0 0.0
    %284 = vmatpush1.msra.mxu0 0.0
    %285 = vmatprep.subr.mxu0 0.0
    %286 = vmatpush1.msra.mxu0 0.0
    %287 = vmatprep.mubr.f32.mxu0 0.0
    %288 = vmatmul.mubr.f32.gmra.mrb[0].mxu0 %v199
    %v289 = vpop.f32.mrb[0].mxu0
    %v290 = vadd.f32 %v221, %v289
    %v291 = vpop.f32.mrb[0].mxu0
    %292 = vdwg.mxu0
    %v293 = vsub.f32 0.0, %v290
    %v294 = vmin.f32 %v293, 80.0
    %v295 = vmul.f32 %v294, 1.442695
    %v296 = vpow.pop %v295
    %v297 = vadd.f32 %v296, 1.0
    %v298 = vrcp.pop %v297
    %v299 = vmul.f32 %v290, %v298
    %v300 = vld [vmem:[#allocation8] sm:$0xff]
    %v301 = vld [vmem:[#allocation8 + $0x8] sm:$0xff]
    %v302 = vld [vmem:[#allocation8 + $0x10] sm:$0xff]
    %v303 = vld [vmem:[#allocation8 + $0x18] sm:$0xff]
    %v304 = vld [vmem:[#allocation8 + $0x20] sm:$0xff]
    %v305 = vld [vmem:[#allocation8 + $0x28] sm:$0xff]
    %v306 = vld [vmem:[#allocation8 + $0x30] sm:$0xff]
    %v307 = vld [vmem:[#allocation8 + $0x38] sm:$0xff]
    %v308 = vld [vmem:[#allocation8 + $0x40] sm:$0xff]
    %v309 = vld [vmem:[#allocation8 + $0x48] sm:$0xff]
    %v310 = vld [vmem:[#allocation8 + $0x50] sm:$0xff]
    %v311 = vld [vmem:[#allocation8 + $0x58] sm:$0xff]
    %v312 = vld [vmem:[#allocation8 + $0x60] sm:$0xff]
    %v313 = vld [vmem:[#allocation8 + $0x68] sm:$0xff]
    %v314 = vld [vmem:[#allocation8 + $0x70] sm:$0xff]
    %v315 = vld [vmem:[#allocation8 + $0x78] sm:$0xff]
    %v316 = vld [vmem:[%s7] sm:$0x1]
    %v318 = vlaneseq
    %v319 = vshrl.u32 %v318, 7
    %v320 = vsub.s32 0, %v319
    %v321 = vrot.slane %v316, %v320
    %323 = vmatprep.subr.mxu0 0.0
    %324 = vmatpush1.msra.mxu0 %v300
    %325 = vmatprep.subr.mxu0 0.0
    %326 = vmatpush1.msra.mxu0 %v301
    %327 = vmatprep.subr.mxu0 0.0
    %328 = vmatpush1.msra.mxu0 %v302
    %329 = vmatprep.subr.mxu0 0.0
    %330 = vmatpush1.msra.mxu0 %v303
    %331 = vmatprep.subr.mxu0 0.0
    %332 = vmatpush1.msra.mxu0 %v304
    %333 = vmatprep.subr.mxu0 0.0
    %334 = vmatpush1.msra.mxu0 %v305
    %335 = vmatprep.subr.mxu0 0.0
    %336 = vmatpush1.msra.mxu0 %v306
    %337 = vmatprep.subr.mxu0 0.0
    %338 = vmatpush1.msra.mxu0 %v307
    %339 = vmatprep.subr.mxu0 0.0
    %340 = vmatpush1.msra.mxu0 %v308
    %341 = vmatprep.subr.mxu0 0.0
    %342 = vmatpush1.msra.mxu0 %v309
    %343 = vmatprep.subr.mxu0 0.0
    %344 = vmatpush1.msra.mxu0 %v310
    %345 = vmatprep.subr.mxu0 0.0
    %346 = vmatpush1.msra.mxu0 %v311
    %347 = vmatprep.subr.mxu0 0.0
    %348 = vmatpush1.msra.mxu0 %v312
    %349 = vmatprep.subr.mxu0 0.0
    %350 = vmatpush1.msra.mxu0 %v313
    %351 = vmatprep.subr.mxu0 0.0
    %352 = vmatpush1.msra.mxu0 %v314
    %353 = vmatprep.subr.mxu0 0.0
    %354 = vmatpush1.msra.mxu0 %v315
    %355 = vmatprep.subr.mxu0 0.0
    %356 = vmatpush1.msra.mxu0 0.0
    %357 = vmatprep.subr.mxu0 0.0
    %358 = vmatpush1.msra.mxu0 0.0
    %359 = vmatprep.subr.mxu0 0.0
    %360 = vmatpush1.msra.mxu0 0.0
    %361 = vmatprep.subr.mxu0 0.0
    %362 = vmatpush1.msra.mxu0 0.0
    %363 = vmatprep.subr.mxu0 0.0
    %364 = vmatpush1.msra.mxu0 0.0
    %365 = vmatprep.subr.mxu0 0.0
    %366 = vmatpush1.msra.mxu0 0.0
    %367 = vmatprep.subr.mxu0 0.0
    %368 = vmatpush1.msra.mxu0 0.0
    %369 = vmatprep.subr.mxu0 0.0
    %370 = vmatpush1.msra.mxu0 0.0
    %371 = vmatprep.subr.mxu0 0.0
    %372 = vmatpush1.msra.mxu0 0.0
    %373 = vmatprep.subr.mxu0 0.0
    %374 = vmatpush1.msra.mxu0 0.0
    %375 = vmatprep.subr.mxu0 0.0
    %376 = vmatpush1.msra.mxu0 0.0
    %377 = vmatprep.subr.mxu0 0.0
    %378 = vmatpush1.msra.mxu0 0.0
    %379 = vmatprep.subr.mxu0 0.0
    %380 = vmatpush1.msra.mxu0 0.0
    %381 = vmatprep.subr.mxu0 0.0
    %382 = vmatpush1.msra.mxu0 0.0
    %383 = vmatprep.subr.mxu0 0.0
    %384 = vmatpush1.msra.mxu0 0.0
    %385 = vmatprep.subr.mxu0 0.0
    %386 = vmatpush1.msra.mxu0 0.0
    %387 = vmatprep.mubr.f32.mxu0 0.0
    %388 = vmatmul.mubr.f32.gmra.mrb[0].mxu0 %v299
    %v389 = vpop.f32.mrb[0].mxu0
    %v390 = vadd.f32 %v321, %v389
    %v391 = vpop.f32.mrb[0].mxu0
    %392 = vdwg.mxu0
    %v393 = vsub.f32 0.0, %v390
    %v394 = vmin.f32 %v393, 80.0
    %v395 = vmul.f32 %v394, 1.442695
    %v396 = vpow.pop %v395
    %v397 = vadd.f32 %v396, 1.0
    %v398 = vrcp.pop %v397
    %v399 = vmul.f32 %v390, %v398
    %v400 = vld [vmem:[#allocation10] sm:$0xff]
    %v401 = vld [vmem:[#allocation10 + $0x8] sm:$0xff]
    %v402 = vld [vmem:[#allocation10 + $0x10] sm:$0xff]
    %v403 = vld [vmem:[#allocation10 + $0x18] sm:$0xff]
    %v404 = vld [vmem:[#allocation10 + $0x20] sm:$0xff]
    %v405 = vld [vmem:[#allocation10 + $0x28] sm:$0xff]
    %v406 = vld [vmem:[#allocation10 + $0x30] sm:$0xff]
    %v407 = vld [vmem:[#allocation10 + $0x38] sm:$0xff]
    %v408 = vld [vmem:[#allocation10 + $0x40] sm:$0xff]
    %v409 = vld [vmem:[#allocation10 + $0x48] sm:$0xff]
    %v410 = vld [vmem:[#allocation10 + $0x50] sm:$0xff]
    %v411 = vld [vmem:[#allocation10 + $0x58] sm:$0xff]
    %v412 = vld [vmem:[#allocation10 + $0x60] sm:$0xff]
    %v413 = vld [vmem:[#allocation10 + $0x68] sm:$0xff]
    %v414 = vld [vmem:[#allocation10 + $0x70] sm:$0xff]
    %v415 = vld [vmem:[#allocation10 + $0x78] sm:$0xff]
    %v416 = vld [vmem:[%s8] sm:$0x1]
    %v418 = vlaneseq
    %v419 = vshrl.u32 %v418, 7
    %v420 = vsub.s32 0, %v419
    %v421 = vrot.slane %v416, %v420
    %423 = vmatprep.subr.mxu0 0.0
    %424 = vmatpush1.msra.mxu0 %v400
    %425 = vmatprep.subr.mxu0 0.0
    %426 = vmatpush1.msra.mxu0 %v401
    %427 = vmatprep.subr.mxu0 0.0
    %428 = vmatpush1.msra.mxu0 %v402
    %429 = vmatprep.subr.mxu0 0.0
    %430 = vmatpush1.msra.mxu0 %v403
    %431 = vmatprep.subr.mxu0 0.0
    %432 = vmatpush1.msra.mxu0 %v404
    %433 = vmatprep.subr.mxu0 0.0
    %434 = vmatpush1.msra.mxu0 %v405
    %435 = vmatprep.subr.mxu0 0.0
    %436 = vmatpush1.msra.mxu0 %v406
    %437 = vmatprep.subr.mxu0 0.0
    %438 = vmatpush1.msra.mxu0 %v407
    %439 = vmatprep.subr.mxu0 0.0
    %440 = vmatpush1.msra.mxu0 %v408
    %441 = vmatprep.subr.mxu0 0.0
    %442 = vmatpush1.msra.mxu0 %v409
    %443 = vmatprep.subr.mxu0 0.0
    %444 = vmatpush1.msra.mxu0 %v410
    %445 = vmatprep.subr.mxu0 0.0
    %446 = vmatpush1.msra.mxu0 %v411
    %447 = vmatprep.subr.mxu0 0.0
    %448 = vmatpush1.msra.mxu0 %v412
    %449 = vmatprep.subr.mxu0 0.0
    %450 = vmatpush1.msra.mxu0 %v413
    %451 = vmatprep.subr.mxu0 0.0
    %452 = vmatpush1.msra.mxu0 %v414
    %453 = vmatprep.subr.mxu0 0.0
    %454 = vmatpush1.msra.mxu0 %v415
    %455 = vmatprep.subr.mxu0 0.0
    %456 = vmatpush1.msra.mxu0 0.0
    %457 = vmatprep.subr.mxu0 0.0
    %458 = vmatpush1.msra.mxu0 0.0
    %459 = vmatprep.subr.mxu0 0.0
    %460 = vmatpush1.msra.mxu0 0.0
    %461 = vmatprep.subr.mxu0 0.0
    %462 = vmatpush1.msra.mxu0 0.0
    %463 = vmatprep.subr.mxu0 0.0
    %464 = vmatpush1.msra.mxu0 0.0
    %465 = vmatprep.subr.mxu0 0.0
    %466 = vmatpush1.msra.mxu0 0.0
    %467 = vmatprep.subr.mxu0 0.0
    %468 = vmatpush1.msra.mxu0 0.0
    %469 = vmatprep.subr.mxu0 0.0
    %470 = vmatpush1.msra.mxu0 0.0
    %471 = vmatprep.subr.mxu0 0.0
    %472 = vmatpush1.msra.mxu0 0.0
    %473 = vmatprep.subr.mxu0 0.0
    %474 = vmatpush1.msra.mxu0 0.0
    %475 = vmatprep.subr.mxu0 0.0
    %476 = vmatpush1.msra.mxu0 0.0
    %477 = vmatprep.subr.mxu0 0.0
    %478 = vmatpush1.msra.mxu0 0.0
    %479 = vmatprep.subr.mxu0 0.0
    %480 = vmatpush1.msra.mxu0 0.0
    %481 = vmatprep.subr.mxu0 0.0
    %482 = vmatpush1.msra.mxu0 0.0
    %483 = vmatprep.subr.mxu0 0.0
    %484 = vmatpush1.msra.mxu0 0.0
    %485 = vmatprep.subr.mxu0 0.0
    %486 = vmatpush1.msra.mxu0 0.0
    %487 = vmatprep.mubr.f32.mxu0 0.0
    %488 = vmatmul.mubr.f32.gmra.mrb[0].mxu0 %v399
    %v489 = vpop.f32.mrb[0].mxu0
    %v490 = vadd.f32 %v421, %v489
    %v491 = vpop.f32.mrb[0].mxu0
    %492 = vdwg.mxu0
    %v493 = vsub.f32 0.0, %v490
    %v494 = vmin.f32 %v493, 80.0
    %v495 = vmul.f32 %v494, 1.442695
    %v496 = vpow.pop %v495
    %v497 = vadd.f32 %v496, 1.0
    %v498 = vrcp.pop %v497
    %v499 = vmul.f32 %v490, %v498
    %500 = vst [vmem:[#allocation11] sm:$0xff] %v499
    // Predicated region
    $region58: #{tpu_custom_call.1} parent=1 // pred_check
      _
    $region59: #{tpu_custom_call.1} parent=1 // pred_check_branch
      %502 = sbr.rel (0) target = $region61
    $region60: #{tpu_custom_call.1} parent=1 // pred_region
      %s504 = ssub.s32 128, 128
      %505 = vsyncadd [#allocation4], %s504
      %s507 = sshll.u32 [#allocation11], 4
      %s508 = int_to_ptr.vmem [resolvable:$true] %s507
      %510 = dma.vmem_to_hbm [thread:$0]  %s508, 128, %s9, [#allocation4]
    $region61: #{tpu_custom_call.1} parent=1 // pred_fallthru
      _
    // Predicated region
    $region62: #{tpu_custom_call.1} parent=1 // pred_check
      _
    $region63: #{tpu_custom_call.1} parent=1 // pred_check_branch
      %512 = sbr.rel (0) target = $region65
    $region64: #{tpu_custom_call.1} parent=1 // pred_region
      %513 = dma.done [#allocation4], 128
    $region65: #{tpu_custom_call.1} parent=1 // pred_fallthru
      _
    %514 = vsyncpa [#allocation3], 1
    %515 = vsyncpa [#allocation6], 1
    %516 = vsyncpa [#allocation9], 1
    %517 = vsyncpa [#allocation4], 1

// kernel: tpu_custom_call.1
$region0: #{tpu_custom_call.1}
  #allocation0 [shape = 'u32[]', space=smem, size = 0x4, offset = 0x4, fixed_abs, tag = 'smem constant byte address 0x4 - core index']
  #allocation1 [shape = 'u32[144,128]{1,0:T(1,128)}', space=vmem, size = 0x12000, scoped, tag = 'internal scratch']
  %s0 = inlined_call_operand.hbm [shape: f32[8,128], index: 0, kind: input, shape index: {}]
  %s1 = inlined_call_operand.hbm [shape: f32[128,128], index: 1, kind: input, shape index: {}]
  %s2 = inlined_call_operand.hbm [shape: f32[128,128], index: 2, kind: input, shape index: {}]
  %s3 = inlined_call_operand.hbm [shape: f32[128,128], index: 3, kind: input, shape index: {}]
  %s4 = inlined_call_operand.hbm [shape: f32[128,128], index: 4, kind: input, shape index: {}]
  %s5 = inlined_call_operand.vmem [shape: f32[1,128], index: 5, kind: input, shape index: {}]
  %s6 = inlined_call_operand.vmem [shape: f32[1,128], index: 6, kind: input, shape index: {}]
  %s7 = inlined_call_operand.vmem [shape: f32[1,128], index: 7, kind: input, shape index: {}]
  %s8 = inlined_call_operand.vmem [shape: f32[1,128], index: 8, kind: input, shape index: {}]
  %s9 = inlined_call_operand.hbm [shape: f32[8,128], index: 9, kind: output, shape index: {}]
  %s10 = sld [smem:[#allocation0]]
  $region66: #{tpu_custom_call.1} parent=0
    _
  %s12 = ssub.s32 1, %s10
  %s13 = scalar_select 0, %s12, %s10
  $region1: #{tpu_custom_call.1} parent=0
    #allocation2 [shape = 'u8[4096]{0}', space=vmem, size = 0x1000, scoped, tag = 'input window, operand 0, single buffered']
    #allocation3 [shape = 's32[1]{0}', space=sflag, size = 0x4, scoped, tag = 'scoped memory for tpu_custom_call.1']
    #allocation4 [shape = 's32[1]{0}', space=sflag, size = 0x4, scoped, tag = 'scoped memory for tpu_custom_call.1']
    #allocation5 [shape = 'u8[65536]{0}', space=vmem, size = 0x10000, scoped, tag = 'input window, operand 1, single buffered']
    #allocation6 [shape = 's32[1]{0}', space=sflag, size = 0x4, scoped, tag = 'scoped memory for tpu_custom_call.1']
    #allocation7 [shape = 'u8[65536]{0}', space=vmem, size = 0x10000, scoped, tag = 'input window, operand 2, single buffered']
    #allocation8 [shape = 'u8[65536]{0}', space=vmem, size = 0x10000, scoped, tag = 'input window, operand 3, single buffered']
    #allocation9 [shape = 's32[1]{0}', space=sflag, size = 0x4, scoped, tag = 'scoped memory for tpu_custom_call.1']
    #allocation10 [shape = 'u8[65536]{0}', space=vmem, size = 0x10000, scoped, tag = 'input window, operand 4, single buffered']
    #allocation11 [shape = 'u8[4096]{0}', space=vmem, size = 0x1000, scoped, tag = 'output window, operand 0, single buffered']
    %14 = vsyncpa [#allocation3], 0
    %15 = vsyncpa [#allocation6], 0
    %16 = vsyncpa [#allocation9], 0
    %17 = vsyncpa [#allocation4], 0
    // Predicated region
    $region2: #{tpu_custom_call.1} parent=1 // pred_check
      _
    $region3: #{tpu_custom_call.1} parent=1 // pred_check_branch
      %19 = sbr.rel (0) target = $region5
    $region4: #{tpu_custom_call.1} parent=1 // pred_region
      %s21 = ssub.s32 128, 128
      %22 = vsyncadd [#allocation3], %s21
      %s24 = sshll.u32 [#allocation2], 4
      %s25 = int_to_ptr.vmem [resolvable:$true] %s24
      %27 = dma.hbm_to_vmem [thread:$0]  %s0, 128, %s25, [#allocation3]
    $region5: #{tpu_custom_call.1} parent=1 // pred_fallthru
      _
    // Predicated region
    $region6: #{tpu_custom_call.1} parent=1 // pred_check
      _
    $region7: #{tpu_custom_call.1} parent=1 // pred_check_branch
      %29 = sbr.rel (0) target = $region9
    $region8: #{tpu_custom_call.1} parent=1 // pred_region
      %s31 = ssub.s32 2048, 2048
      %32 = vsyncadd [#allocation6], %s31
      %s33 = sshll.u32 [#allocation5], 4
      %s34 = int_to_ptr.vmem [resolvable:$true] %s33
      %39 = dma.hbm_to_vmem [thread:$0]  %s1, 2048, %s34, [#allocation6], 128, 128, 8
    $region9: #{tpu_custom_call.1} parent=1 // pred_fallthru
      _
    // Predicated region
    $region10: #{tpu_custom_call.1} parent=1 // pred_check
      _
    $region11: #{tpu_custom_call.1} parent=1 // pred_check_branch
      %41 = sbr.rel (0) target = $region13
    $region12: #{tpu_custom_call.1} parent=1 // pred_region
      %s43 = ssub.s32 2048, 2048
      %44 = vsyncadd [#allocation6], %s43
      %s45 = sshll.u32 [#allocation7], 4
      %s46 = int_to_ptr.vmem [resolvable:$true] %s45
      %51 = dma.hbm_to_vmem [thread:$0]  %s2, 2048, %s46, [#allocation6], 128, 128, 8
    $region13: #{tpu_custom_call.1} parent=1 // pred_fallthru
      _
    // Predicated region
    $region14: #{tpu_custom_call.1} parent=1 // pred_check
      _
    $region15: #{tpu_custom_call.1} parent=1 // pred_check_branch
      %53 = sbr.rel (0) target = $region17
    $region16: #{tpu_custom_call.1} parent=1 // pred_region
      %s55 = ssub.s32 2048, 2048
      %56 = vsyncadd [#allocation9], %s55
      %s57 = sshll.u32 [#allocation8], 4
      %s58 = int_to_ptr.vmem [resolvable:$true] %s57
      %63 = dma.hbm_to_vmem [thread:$0]  %s3, 2048, %s58, [#allocation9], 128, 128, 8
    $region17: #{tpu_custom_call.1} parent=1 // pred_fallthru
      _
    // Predicated region
    $region18: #{tpu_custom_call.1} parent=1 // pred_check
      _
    $region19: #{tpu_custom_call.1} parent=1 // pred_check_branch
      %65 = sbr.rel (0) target = $region21
    $region20: #{tpu_custom_call.1} parent=1 // pred_region
      %s67 = ssub.s32 2048, 2048
      %68 = vsyncadd [#allocation9], %s67
      %s69 = sshll.u32 [#allocation10], 4
      %s70 = int_to_ptr.vmem [resolvable:$true] %s69
      %75 = dma.hbm_to_vmem [thread:$0]  %s4, 2048, %s70, [#allocation9], 128, 128, 8
    $region21: #{tpu_custom_call.1} parent=1 // pred_fallthru
      _
    // Predicated region
    $region22: #{tpu_custom_call.1} parent=1 // pred_check
      _
    $region23: #{tpu_custom_call.1} parent=1 // pred_check_branch
      %77 = sbr.rel (0) target = $region25
    $region24: #{tpu_custom_call.1} parent=1 // pred_region
      _
    $region25: #{tpu_custom_call.1} parent=1 // pred_fallthru
      _
    // Predicated region
    $region26: #{tpu_custom_call.1} parent=1 // pred_check
      _
    $region27: #{tpu_custom_call.1} parent=1 // pred_check_branch
      %79 = sbr.rel (0) target = $region29
    $region28: #{tpu_custom_call.1} parent=1 // pred_region
      _
    $region29: #{tpu_custom_call.1} parent=1 // pred_fallthru
      _
    // Predicated region
    $region30: #{tpu_custom_call.1} parent=1 // pred_check
      _
    $region31: #{tpu_custom_call.1} parent=1 // pred_check_branch
      %81 = sbr.rel (0) target = $region33
    $region32: #{tpu_custom_call.1} parent=1 // pred_region
      _
    $region33: #{tpu_custom_call.1} parent=1 // pred_fallthru
      _
    // Predicated region
    $region34: #{tpu_custom_call.1} parent=1 // pred_check
      _
    $region35: #{tpu_custom_call.1} parent=1 // pred_check_branch
      %83 = sbr.rel (0) target = $region37
    $region36: #{tpu_custom_call.1} parent=1 // pred_region
      _
    $region37: #{tpu_custom_call.1} parent=1 // pred_fallthru
      _
    // Predicated region
    $region38: #{tpu_custom_call.1} parent=1 // pred_check
      _
    $region39: #{tpu_custom_call.1} parent=1 // pred_check_branch
      %85 = sbr.rel (0) target = $region41
    $region40: #{tpu_custom_call.1} parent=1 // pred_region
      %86 = dma.done [#allocation3], 128
    $region41: #{tpu_custom_call.1} parent=1 // pred_fallthru
      _
    // Predicated region
    $region42: #{tpu_custom_call.1} parent=1 // pred_check
      _
    $region43: #{tpu_custom_call.1} parent=1 // pred_check_branch
      %88 = sbr.rel (0) target = $region45
    $region44: #{tpu_custom_call.1} parent=1 // pred_region
      %89 = dma.done [#allocation6], 2048
    $region45: #{tpu_custom_call.1} parent=1 // pred_fallthru
      _
    // Predicated region
    $region46: #{tpu_custom_call.1} parent=1 // pred_check
      _
    $region47: #{tpu_custom_call.1} parent=1 // pred_check_branch
      %91 = sbr.rel (0) target = $region49
    $region48: #{tpu_custom_call.1} parent=1 // pred_region
      %92 = dma.done [#allocation6], 2048
    $region49: #{tpu_custom_call.1} parent=1 // pred_fallthru
      _
    // Predicated region
    $region50: #{tpu_custom_call.1} parent=1 // pred_check
      _
    $region51: #{tpu_custom_call.1} parent=1 // pred_check_branch
      %94 = sbr.rel (0) target = $region53
    $region52: #{tpu_custom_call.1} parent=1 // pred_region
      %95 = dma.done [#allocation9], 2048
    $region53: #{tpu_custom_call.1} parent=1 // pred_fallthru
      _
    // Predicated region
    $region54: #{tpu_custom_call.1} parent=1 // pred_check
      _
    $region55: #{tpu_custom_call.1} parent=1 // pred_check_branch
      %97 = sbr.rel (0) target = $region57
    $region56: #{tpu_custom_call.1} parent=1 // pred_region
      %98 = dma.done [#allocation9], 2048
    $region57: #{tpu_custom_call.1} parent=1 // pred_fallthru
      _
    %v99 = vld [vmem:[#allocation2] sm:$0xff]
    %v100 = vld [vmem:[#allocation5] sm:$0xff]
    %v101 = vld [vmem:[#allocation5 + $0x8] sm:$0xff]
    %v102 = vld [vmem:[#allocation5 + $0x10] sm:$0xff]
    %v103 = vld [vmem:[#allocation5 + $0x18] sm:$0xff]
    %v104 = vld [vmem:[#allocation5 + $0x20] sm:$0xff]
    %v105 = vld [vmem:[#allocation5 + $0x28] sm:$0xff]
    %v106 = vld [vmem:[#allocation5 + $0x30] sm:$0xff]
    %v107 = vld [vmem:[#allocation5 + $0x38] sm:$0xff]
    %v108 = vld [vmem:[#allocation5 + $0x40] sm:$0xff]
    %v109 = vld [vmem:[#allocation5 + $0x48] sm:$0xff]
    %v110 = vld [vmem:[#allocation5 + $0x50] sm:$0xff]
    %v111 = vld [vmem:[#allocation5 + $0x58] sm:$0xff]
    %v112 = vld [vmem:[#allocation5 + $0x60] sm:$0xff]
    %v113 = vld [vmem:[#allocation5 + $0x68] sm:$0xff]
    %v114 = vld [vmem:[#allocation5 + $0x70] sm:$0xff]
    %v115 = vld [vmem:[#allocation5 + $0x78] sm:$0xff]
    %v116 = vld [vmem:[%s5] sm:$0x1]
    %v118 = vlaneseq
    %v119 = vshrl.u32 %v118, 7
    %v120 = vsub.s32 0, %v119
    %v121 = vrot.slane %v116, %v120
    %123 = vmatprep.subr.mxu0 0.0
    %124 = vmatpush1.msra.mxu0 %v100
    %125 = vmatprep.subr.mxu0 0.0
    %126 = vmatpush1.msra.mxu0 %v101
    %127 = vmatprep.subr.mxu0 0.0
    %128 = vmatpush1.msra.mxu0 %v102
    %129 = vmatprep.subr.mxu0 0.0
    %130 = vmatpush1.msra.mxu0 %v103
    %131 = vmatprep.subr.mxu0 0.0
    %132 = vmatpush1.msra.mxu0 %v104
    %133 = vmatprep.subr.mxu0 0.0
    %134 = vmatpush1.msra.mxu0 %v105
    %135 = vmatprep.subr.mxu0 0.0
    %136 = vmatpush1.msra.mxu0 %v106
    %137 = vmatprep.subr.mxu0 0.0
    %138 = vmatpush1.msra.mxu0 %v107
    %139 = vmatprep.subr.mxu0 0.0
    %140 = vmatpush1.msra.mxu0 %v108
    %141 = vmatprep.subr.mxu0 0.0
    %142 = vmatpush1.msra.mxu0 %v109
    %143 = vmatprep.subr.mxu0 0.0
    %144 = vmatpush1.msra.mxu0 %v110
    %145 = vmatprep.subr.mxu0 0.0
    %146 = vmatpush1.msra.mxu0 %v111
    %147 = vmatprep.subr.mxu0 0.0
    %148 = vmatpush1.msra.mxu0 %v112
    %149 = vmatprep.subr.mxu0 0.0
    %150 = vmatpush1.msra.mxu0 %v113
    %151 = vmatprep.subr.mxu0 0.0
    %152 = vmatpush1.msra.mxu0 %v114
    %153 = vmatprep.subr.mxu0 0.0
    %154 = vmatpush1.msra.mxu0 %v115
    %155 = vmatprep.subr.mxu0 0.0
    %156 = vmatpush1.msra.mxu0 0.0
    %157 = vmatprep.subr.mxu0 0.0
    %158 = vmatpush1.msra.mxu0 0.0
    %159 = vmatprep.subr.mxu0 0.0
    %160 = vmatpush1.msra.mxu0 0.0
    %161 = vmatprep.subr.mxu0 0.0
    %162 = vmatpush1.msra.mxu0 0.0
    %163 = vmatprep.subr.mxu0 0.0
    %164 = vmatpush1.msra.mxu0 0.0
    %165 = vmatprep.subr.mxu0 0.0
    %166 = vmatpush1.msra.mxu0 0.0
    %167 = vmatprep.subr.mxu0 0.0
    %168 = vmatpush1.msra.mxu0 0.0
    %169 = vmatprep.subr.mxu0 0.0
    %170 = vmatpush1.msra.mxu0 0.0
    %171 = vmatprep.subr.mxu0 0.0
    %172 = vmatpush1.msra.mxu0 0.0
    %173 = vmatprep.subr.mxu0 0.0
    %174 = vmatpush1.msra.mxu0 0.0
    %175 = vmatprep.subr.mxu0 0.0
    %176 = vmatpush1.msra.mxu0 0.0
    %177 = vmatprep.subr.mxu0 0.0
    %178 = vmatpush1.msra.mxu0 0.0
    %179 = vmatprep.subr.mxu0 0.0
    %180 = vmatpush1.msra.mxu0 0.0
    %181 = vmatprep.subr.mxu0 0.0
    %182 = vmatpush1.msra.mxu0 0.0
    %183 = vmatprep.subr.mxu0 0.0
    %184 = vmatpush1.msra.mxu0 0.0
    %185 = vmatprep.subr.mxu0 0.0
    %186 = vmatpush1.msra.mxu0 0.0
    %187 = vmatprep.mubr.f32.mxu0 0.0
    %188 = vmatmul.mubr.f32.gmra.mrb[0].mxu0 %v99
    %v189 = vpop.f32.mrb[0].mxu0
    %v190 = vadd.f32 %v121, %v189
    %v191 = vpop.f32.mrb[0].mxu0
    %192 = vdwg.mxu0
    %v193 = vsub.f32 0.0, %v190
    %v194 = vmin.f32 %v193, 80.0
    %v195 = vmul.f32 %v194, 1.442695
    %v196 = vpow.pop %v195
    %v197 = vadd.f32 %v196, 1.0
    %v198 = vrcp.pop %v197
    %v199 = vmul.f32 %v190, %v198
    %v200 = vld [vmem:[#allocation7] sm:$0xff]
    %v201 = vld [vmem:[#allocation7 + $0x8] sm:$0xff]
    %v202 = vld [vmem:[#allocation7 + $0x10] sm:$0xff]
    %v203 = vld [vmem:[#allocation7 + $0x18] sm:$0xff]
    %v204 = vld [vmem:[#allocation7 + $0x20] sm:$0xff]
    %v205 = vld [vmem:[#allocation7 + $0x28] sm:$0xff]
    %v206 = vld [vmem:[#allocation7 + $0x30] sm:$0xff]
    %v207 = vld [vmem:[#allocation7 + $0x38] sm:$0xff]
    %v208 = vld [vmem:[#allocation7 + $0x40] sm:$0xff]
    %v209 = vld [vmem:[#allocation7 + $0x48] sm:$0xff]
    %v210 = vld [vmem:[#allocation7 + $0x50] sm:$0xff]
    %v211 = vld [vmem:[#allocation7 + $0x58] sm:$0xff]
    %v212 = vld [vmem:[#allocation7 + $0x60] sm:$0xff]
    %v213 = vld [vmem:[#allocation7 + $0x68] sm:$0xff]
    %v214 = vld [vmem:[#allocation7 + $0x70] sm:$0xff]
    %v215 = vld [vmem:[#allocation7 + $0x78] sm:$0xff]
    %v216 = vld [vmem:[%s6] sm:$0x1]
    %v218 = vlaneseq
    %v219 = vshrl.u32 %v218, 7
    %v220 = vsub.s32 0, %v219
    %v221 = vrot.slane %v216, %v220
    %223 = vmatprep.subr.mxu0 0.0
    %224 = vmatpush1.msra.mxu0 %v200
    %225 = vmatprep.subr.mxu0 0.0
    %226 = vmatpush1.msra.mxu0 %v201
    %227 = vmatprep.subr.mxu0 0.0
    %228 = vmatpush1.msra.mxu0 %v202
    %229 = vmatprep.subr.mxu0 0.0
    %230 = vmatpush1.msra.mxu0 %v203
    %231 = vmatprep.subr.mxu0 0.0
    %232 = vmatpush1.msra.mxu0 %v204
    %233 = vmatprep.subr.mxu0 0.0
    %234 = vmatpush1.msra.mxu0 %v205
    %235 = vmatprep.subr.mxu0 0.0
    %236 = vmatpush1.msra.mxu0 %v206
    %237 = vmatprep.subr.mxu0 0.0
    %238 = vmatpush1.msra.mxu0 %v207
    %239 = vmatprep.subr.mxu0 0.0
    %240 = vmatpush1.msra.mxu0 %v208
    %241 = vmatprep.subr.mxu0 0.0
    %242 = vmatpush1.msra.mxu0 %v209
    %243 = vmatprep.subr.mxu0 0.0
    %244 = vmatpush1.msra.mxu0 %v210
    %245 = vmatprep.subr.mxu0 0.0
    %246 = vmatpush1.msra.mxu0 %v211
    %247 = vmatprep.subr.mxu0 0.0
    %248 = vmatpush1.msra.mxu0 %v212
    %249 = vmatprep.subr.mxu0 0.0
    %250 = vmatpush1.msra.mxu0 %v213
    %251 = vmatprep.subr.mxu0 0.0
    %252 = vmatpush1.msra.mxu0 %v214
    %253 = vmatprep.subr.mxu0 0.0
    %254 = vmatpush1.msra.mxu0 %v215
    %255 = vmatprep.subr.mxu0 0.0
    %256 = vmatpush1.msra.mxu0 0.0
    %257 = vmatprep.subr.mxu0 0.0
    %258 = vmatpush1.msra.mxu0 0.0
    %259 = vmatprep.subr.mxu0 0.0
    %260 = vmatpush1.msra.mxu0 0.0
    %261 = vmatprep.subr.mxu0 0.0
    %262 = vmatpush1.msra.mxu0 0.0
    %263 = vmatprep.subr.mxu0 0.0
    %264 = vmatpush1.msra.mxu0 0.0
    %265 = vmatprep.subr.mxu0 0.0
    %266 = vmatpush1.msra.mxu0 0.0
    %267 = vmatprep.subr.mxu0 0.0
    %268 = vmatpush1.msra.mxu0 0.0
    %269 = vmatprep.subr.mxu0 0.0
    %270 = vmatpush1.msra.mxu0 0.0
    %271 = vmatprep.subr.mxu0 0.0
    %272 = vmatpush1.msra.mxu0 0.0
    %273 = vmatprep.subr.mxu0 0.0
    %274 = vmatpush1.msra.mxu0 0.0
    %275 = vmatprep.subr.mxu0 0.0
    %276 = vmatpush1.msra.mxu0 0.0
    %277 = vmatprep.subr.mxu0 0.0
    %278 = vmatpush1.msra.mxu0 0.0
    %279 = vmatprep.subr.mxu0 0.0
    %280 = vmatpush1.msra.mxu0 0.0
    %281 = vmatprep.subr.mxu0 0.0
    %282 = vmatpush1.msra.mxu0 0.0
    %283 = vmatprep.subr.mxu0 0.0
    %284 = vmatpush1.msra.mxu0 0.0
    %285 = vmatprep.subr.mxu0 0.0
    %286 = vmatpush1.msra.mxu0 0.0
    %287 = vmatprep.mubr.f32.mxu0 0.0
    %288 = vmatmul.mubr.f32.gmra.mrb[0].mxu0 %v199
    %v289 = vpop.f32.mrb[0].mxu0
    %v290 = vadd.f32 %v221, %v289
    %v291 = vpop.f32.mrb[0].mxu0
    %292 = vdwg.mxu0
    %v293 = vsub.f32 0.0, %v290
    %v294 = vmin.f32 %v293, 80.0
    %v295 = vmul.f32 %v294, 1.442695
    %v296 = vpow.pop %v295
    %v297 = vadd.f32 %v296, 1.0
    %v298 = vrcp.pop %v297
    %v299 = vmul.f32 %v290, %v298
    %v300 = vld [vmem:[#allocation8] sm:$0xff]
    %v301 = vld [vmem:[#allocation8 + $0x8] sm:$0xff]
    %v302 = vld [vmem:[#allocation8 + $0x10] sm:$0xff]
    %v303 = vld [vmem:[#allocation8 + $0x18] sm:$0xff]
    %v304 = vld [vmem:[#allocation8 + $0x20] sm:$0xff]
    %v305 = vld [vmem:[#allocation8 + $0x28] sm:$0xff]
    %v306 = vld [vmem:[#allocation8 + $0x30] sm:$0xff]
    %v307 = vld [vmem:[#allocation8 + $0x38] sm:$0xff]
    %v308 = vld [vmem:[#allocation8 + $0x40] sm:$0xff]
    %v309 = vld [vmem:[#allocation8 + $0x48] sm:$0xff]
    %v310 = vld [vmem:[#allocation8 + $0x50] sm:$0xff]
    %v311 = vld [vmem:[#allocation8 + $0x58] sm:$0xff]
    %v312 = vld [vmem:[#allocation8 + $0x60] sm:$0xff]
    %v313 = vld [vmem:[#allocation8 + $0x68] sm:$0xff]
    %v314 = vld [vmem:[#allocation8 + $0x70] sm:$0xff]
    %v315 = vld [vmem:[#allocation8 + $0x78] sm:$0xff]
    %v316 = vld [vmem:[%s7] sm:$0x1]
    %v318 = vlaneseq
    %v319 = vshrl.u32 %v318, 7
    %v320 = vsub.s32 0, %v319
    %v321 = vrot.slane %v316, %v320
    %323 = vmatprep.subr.mxu0 0.0
    %324 = vmatpush1.msra.mxu0 %v300
    %325 = vmatprep.subr.mxu0 0.0
    %326 = vmatpush1.msra.mxu0 %v301
    %327 = vmatprep.subr.mxu0 0.0
    %328 = vmatpush1.msra.mxu0 %v302
    %329 = vmatprep.subr.mxu0 0.0
    %330 = vmatpush1.msra.mxu0 %v303
    %331 = vmatprep.subr.mxu0 0.0
    %332 = vmatpush1.msra.mxu0 %v304
    %333 = vmatprep.subr.mxu0 0.0
    %334 = vmatpush1.msra.mxu0 %v305
    %335 = vmatprep.subr.mxu0 0.0
    %336 = vmatpush1.msra.mxu0 %v306
    %337 = vmatprep.subr.mxu0 0.0
    %338 = vmatpush1.msra.mxu0 %v307
    %339 = vmatprep.subr.mxu0 0.0
    %340 = vmatpush1.msra.mxu0 %v308
    %341 = vmatprep.subr.mxu0 0.0
    %342 = vmatpush1.msra.mxu0 %v309
    %343 = vmatprep.subr.mxu0 0.0
    %344 = vmatpush1.msra.mxu0 %v310
    %345 = vmatprep.subr.mxu0 0.0
    %346 = vmatpush1.msra.mxu0 %v311
    %347 = vmatprep.subr.mxu0 0.0
    %348 = vmatpush1.msra.mxu0 %v312
    %349 = vmatprep.subr.mxu0 0.0
    %350 = vmatpush1.msra.mxu0 %v313
    %351 = vmatprep.subr.mxu0 0.0
    %352 = vmatpush1.msra.mxu0 %v314
    %353 = vmatprep.subr.mxu0 0.0
    %354 = vmatpush1.msra.mxu0 %v315
    %355 = vmatprep.subr.mxu0 0.0
    %356 = vmatpush1.msra.mxu0 0.0
    %357 = vmatprep.subr.mxu0 0.0
    %358 = vmatpush1.msra.mxu0 0.0
    %359 = vmatprep.subr.mxu0 0.0
    %360 = vmatpush1.msra.mxu0 0.0
    %361 = vmatprep.subr.mxu0 0.0
    %362 = vmatpush1.msra.mxu0 0.0
    %363 = vmatprep.subr.mxu0 0.0
    %364 = vmatpush1.msra.mxu0 0.0
    %365 = vmatprep.subr.mxu0 0.0
    %366 = vmatpush1.msra.mxu0 0.0
    %367 = vmatprep.subr.mxu0 0.0
    %368 = vmatpush1.msra.mxu0 0.0
    %369 = vmatprep.subr.mxu0 0.0
    %370 = vmatpush1.msra.mxu0 0.0
    %371 = vmatprep.subr.mxu0 0.0
    %372 = vmatpush1.msra.mxu0 0.0
    %373 = vmatprep.subr.mxu0 0.0
    %374 = vmatpush1.msra.mxu0 0.0
    %375 = vmatprep.subr.mxu0 0.0
    %376 = vmatpush1.msra.mxu0 0.0
    %377 = vmatprep.subr.mxu0 0.0
    %378 = vmatpush1.msra.mxu0 0.0
    %379 = vmatprep.subr.mxu0 0.0
    %380 = vmatpush1.msra.mxu0 0.0
    %381 = vmatprep.subr.mxu0 0.0
    %382 = vmatpush1.msra.mxu0 0.0
    %383 = vmatprep.subr.mxu0 0.0
    %384 = vmatpush1.msra.mxu0 0.0
    %385 = vmatprep.subr.mxu0 0.0
    %386 = vmatpush1.msra.mxu0 0.0
    %387 = vmatprep.mubr.f32.mxu0 0.0
    %388 = vmatmul.mubr.f32.gmra.mrb[0].mxu0 %v299
    %v389 = vpop.f32.mrb[0].mxu0
    %v390 = vadd.f32 %v321, %v389
    %v391 = vpop.f32.mrb[0].mxu0
    %392 = vdwg.mxu0
    %v393 = vsub.f32 0.0, %v390
    %v394 = vmin.f32 %v393, 80.0
    %v395 = vmul.f32 %v394, 1.442695
    %v396 = vpow.pop %v395
    %v397 = vadd.f32 %v396, 1.0
    %v398 = vrcp.pop %v397
    %v399 = vmul.f32 %v390, %v398
    %v400 = vld [vmem:[#allocation10] sm:$0xff]
    %v401 = vld [vmem:[#allocation10 + $0x8] sm:$0xff]
    %v402 = vld [vmem:[#allocation10 + $0x10] sm:$0xff]
    %v403 = vld [vmem:[#allocation10 + $0x18] sm:$0xff]
    %v404 = vld [vmem:[#allocation10 + $0x20] sm:$0xff]
    %v405 = vld [vmem:[#allocation10 + $0x28] sm:$0xff]
    %v406 = vld [vmem:[#allocation10 + $0x30] sm:$0xff]
    %v407 = vld [vmem:[#allocation10 + $0x38] sm:$0xff]
    %v408 = vld [vmem:[#allocation10 + $0x40] sm:$0xff]
    %v409 = vld [vmem:[#allocation10 + $0x48] sm:$0xff]
    %v410 = vld [vmem:[#allocation10 + $0x50] sm:$0xff]
    %v411 = vld [vmem:[#allocation10 + $0x58] sm:$0xff]
    %v412 = vld [vmem:[#allocation10 + $0x60] sm:$0xff]
    %v413 = vld [vmem:[#allocation10 + $0x68] sm:$0xff]
    %v414 = vld [vmem:[#allocation10 + $0x70] sm:$0xff]
    %v415 = vld [vmem:[#allocation10 + $0x78] sm:$0xff]
    %v416 = vld [vmem:[%s8] sm:$0x1]
    %v418 = vlaneseq
    %v419 = vshrl.u32 %v418, 7
    %v420 = vsub.s32 0, %v419
    %v421 = vrot.slane %v416, %v420
    %423 = vmatprep.subr.mxu0 0.0
    %424 = vmatpush1.msra.mxu0 %v400
    %425 = vmatprep.subr.mxu0 0.0
    %426 = vmatpush1.msra.mxu0 %v401
    %427 = vmatprep.subr.mxu0 0.0
    %428 = vmatpush1.msra.mxu0 %v402
    %429 = vmatprep.subr.mxu0 0.0
    %430 = vmatpush1.msra.mxu0 %v403
    %431 = vmatprep.subr.mxu0 0.0
    %432 = vmatpush1.msra.mxu0 %v404
    %433 = vmatprep.subr.mxu0 0.0
    %434 = vmatpush1.msra.mxu0 %v405
    %435 = vmatprep.subr.mxu0 0.0
    %436 = vmatpush1.msra.mxu0 %v406
    %437 = vmatprep.subr.mxu0 0.0
    %438 = vmatpush1.msra.mxu0 %v407
    %439 = vmatprep.subr.mxu0 0.0
    %440 = vmatpush1.msra.mxu0 %v408
    %441 = vmatprep.subr.mxu0 0.0
    %442 = vmatpush1.msra.mxu0 %v409
    %443 = vmatprep.subr.mxu0 0.0
    %444 = vmatpush1.msra.mxu0 %v410
    %445 = vmatprep.subr.mxu0 0.0
    %446 = vmatpush1.msra.mxu0 %v411
    %447 = vmatprep.subr.mxu0 0.0
    %448 = vmatpush1.msra.mxu0 %v412
    %449 = vmatprep.subr.mxu0 0.0
    %450 = vmatpush1.msra.mxu0 %v413
    %451 = vmatprep.subr.mxu0 0.0
    %452 = vmatpush1.msra.mxu0 %v414
    %453 = vmatprep.subr.mxu0 0.0
    %454 = vmatpush1.msra.mxu0 %v415
    %455 = vmatprep.subr.mxu0 0.0
    %456 = vmatpush1.msra.mxu0 0.0
    %457 = vmatprep.subr.mxu0 0.0
    %458 = vmatpush1.msra.mxu0 0.0
    %459 = vmatprep.subr.mxu0 0.0
    %460 = vmatpush1.msra.mxu0 0.0
    %461 = vmatprep.subr.mxu0 0.0
    %462 = vmatpush1.msra.mxu0 0.0
    %463 = vmatprep.subr.mxu0 0.0
    %464 = vmatpush1.msra.mxu0 0.0
    %465 = vmatprep.subr.mxu0 0.0
    %466 = vmatpush1.msra.mxu0 0.0
    %467 = vmatprep.subr.mxu0 0.0
    %468 = vmatpush1.msra.mxu0 0.0
    %469 = vmatprep.subr.mxu0 0.0
    %470 = vmatpush1.msra.mxu0 0.0
    %471 = vmatprep.subr.mxu0 0.0
    %472 = vmatpush1.msra.mxu0 0.0
    %473 = vmatprep.subr.mxu0 0.0
    %474 = vmatpush1.msra.mxu0 0.0
    %475 = vmatprep.subr.mxu0 0.0
    %476 = vmatpush1.msra.mxu0 0.0
    %477 = vmatprep.subr.mxu0 0.0
    %478 = vmatpush1.msra.mxu0 0.0
    %479 = vmatprep.subr.mxu0 0.0
    %480 = vmatpush1.msra.mxu0 0.0
    %481 = vmatprep.subr.mxu0 0.0
    %482 = vmatpush1.msra.mxu0 0.0
    %483 = vmatprep.subr.mxu0 0.0
    %484 = vmatpush1.msra.mxu0 0.0
    %485 = vmatprep.subr.mxu0 0.0
    %486 = vmatpush1.msra.mxu0 0.0
    %487 = vmatprep.mubr.f32.mxu0 0.0
    %488 = vmatmul.mubr.f32.gmra.mrb[0].mxu0 %v399
    %v489 = vpop.f32.mrb[0].mxu0
    %v490 = vadd.f32 %v421, %v489
    %v491 = vpop.f32.mrb[0].mxu0
    %492 = vdwg.mxu0
    %v493 = vsub.f32 0.0, %v490
    %v494 = vmin.f32 %v493, 80.0
    %v495 = vmul.f32 %v494, 1.442695
    %v496 = vpow.pop %v495
    %v497 = vadd.f32 %v496, 1.0
    %v498 = vrcp.pop %v497
    %v499 = vmul.f32 %v490, %v498
    %500 = vst [vmem:[#allocation11] sm:$0xff] %v499
    // Predicated region
    $region58: #{tpu_custom_call.1} parent=1 // pred_check
      _
    $region59: #{tpu_custom_call.1} parent=1 // pred_check_branch
      %502 = sbr.rel (0) target = $region61
    $region60: #{tpu_custom_call.1} parent=1 // pred_region
      %s504 = ssub.s32 128, 128
      %505 = vsyncadd [#allocation4], %s504
      %s507 = sshll.u32 [#allocation11], 4
      %s508 = int_to_ptr.vmem [resolvable:$true] %s507
      %510 = dma.vmem_to_hbm [thread:$0]  %s508, 128, %s9, [#allocation4]
    $region61: #{tpu_custom_call.1} parent=1 // pred_fallthru
      _
    // Predicated region
    $region62: #{tpu_custom_call.1} parent=1 // pred_check
      _
    $region63: #{tpu_custom_call.1} parent=1 // pred_check_branch
      %512 = sbr.rel (0) target = $region65
    $region64: #{tpu_custom_call.1} parent=1 // pred_region
      %513 = dma.done [#allocation4], 128
    $region65: #{tpu_custom_call.1} parent=1 // pred_fallthru
      _
    %514 = vsyncpa [#allocation3], 1
    %515 = vsyncpa [#allocation6], 1
    %516 = vsyncpa [#allocation9], 1
    %517 = vsyncpa [#allocation4], 1

</llo_original>
